<compile_context>
chip_gen: v7x
topology: tpu7x:2x2x1
jax: 0.10.0
libtpu: 0.0.40
codegen_flags: <defaults>
</compile_context>

<pallas_src>
import functools

import numpy as np
import jax
import jax.numpy as jnp
from jax.experimental import pallas as pl
from jax.experimental.pallas import tpu as pltpu


# ----------------------------------------------------------------------------
# helpers
# ----------------------------------------------------------------------------
def bilinear_upsample_matrix(n):
    """Interpolation matrix for x2 bilinear upsample, align_corners=False
    (identical to F.interpolate(scale_factor=2, mode='bilinear'))."""
    m = np.zeros((2 * n, n), dtype=np.float32)
    for o in range(2 * n):
        src = max((o + 0.5) / 2.0 - 0.5, 0.0)
        i0 = int(np.floor(src))
        i1 = min(i0 + 1, n - 1)
        lam = src - i0
        m[o, i0] += 1.0 - lam
        m[o, i1] += lam
    return jnp.asarray(m)


def _choose_tile(total, bytes_per_col, granule=128,
                 budget_bytes=16 * 1024 * 1024, max_cols=16384):
    """Pixel-tile width: a multiple of `granule`, keeping the double-buffered
    per-step working set under `budget_bytes`.  The grid uses cdiv + zero pad,
    so no divisibility of `total` is required."""
    target = max(granule, min(max_cols, budget_bytes // max(bytes_per_col, 1)))
    target = (target // granule) * granule
    total_pad = ((total + granule - 1) // granule) * granule
    return min(target, total_pad)


def _pad_cols(a, n):
    """Zero-pad the last (pixel) axis of a (B, C, N) array up to n columns."""
    pad = n - a.shape[-1]
    if pad == 0:
        return a
    return jnp.pad(a, ((0, 0), (0, 0), (0, pad)))


# simplified FLOP counters (stand-ins for cal_op_flops)
def count_relu_flop(h, w, c):
    return float(h * w * c) / 1e6


def count_conv_flop(h, w, cin, cout, k, stride=1):
    oh, ow = h // stride, w // stride
    return float(oh * ow * cin * cout * k * k * 2) / 1e6


def count_convbnrelu_flop(h, w, cin, cout, k, stride=1):
    oh, ow = h // stride, w // stride
    return (count_conv_flop(h, w, cin, cout, k, stride)
            + 2.0 * float(oh * ow * cout) / 1e6
            + count_relu_flop(oh, ow, cout))


def count_pool_flop(h, w, c, k, stride):
    return float(h * w * c * k * k) / 1e6


# ----------------------------------------------------------------------------
# Pallas kernels
# ----------------------------------------------------------------------------
def gate_kernel(x_ref, w1_ref, w2_ref, b2_ref, gate_ref, acc_ref, *, inv_hw):
    """gate_conv_beta fused: conv1x1(no bias)+ReLU -> global average pool ->
    FC (C/2 -> 3, bias) -> relu(tanh(.)).

    Grid (B, pixel tiles).  acc_ref accumulates per-batch channel sums across
    the tiles; the FC + soft_gate run once on the last tile (EUP tanh)."""
    t = pl.program_id(1)

    @pl.when(t == 0)
    def _init():
        acc_ref[...] = jnp.zeros_like(acc_ref)

    y = jnp.maximum(
        jnp.dot(w1_ref[...], x_ref[0], preferred_element_type=jnp.float32), 0.0)
    acc_ref[...] += jnp.sum(y, axis=1, keepdims=True)            # (C/2, 1)

    @pl.when(t == pl.num_programs(1) - 1)
    def _finalize():
        pooled = acc_ref[...] * inv_hw                           # (C/2, 1)
        logits = jnp.dot(w2_ref[...], pooled,
                         preferred_element_type=jnp.float32) + b2_ref[...]
        gate_ref[0] = jnp.maximum(jnp.tanh(logits), 0.0)         # (3, 1)


def cell_kernel(gate_ref, x_ref, xs_ref, w_op_ref, w_up_ref, w_down_ref,
                keep_ref, up_ref, down_ref):
    """Fused Mixed_OP + res_keep + res_up conv + res_down conv.

    Grid (B, pixel tiles).  The (B, 3, 1) gate lives in SMEM and is read as
    per-batch scalars.  res_down (stride-2 1x1 conv) recomputes the pointwise
    Mixed_OP on the quarter-resolution subsample stream so the full-resolution
    h_l never round-trips through HBM."""
    b = pl.program_id(0)
    g_keep = gate_ref[b, 0, 0]
    g_up = gate_ref[b, 1, 0]
    g_down = gate_ref[b, 2, 0]
    g_mask = ((g_keep + g_up + g_down) < 0.0001).astype(jnp.float32)

    # ---- full-resolution tile: Mixed_OP (conv1x1+ReLU + Identity) ----------
    x = x_ref[0]                                                 # (C_in, thw)
    h_keep = jnp.maximum(
        jnp.maximum(jnp.dot(w_op_ref[...], x,
                            preferred_element_type=jnp.float32), 0.0) + x, 0.0)
    keep_ref[0] = (g_mask * x + g_keep * h_keep).astype(keep_ref.dtype)
    up_ref[0] = (g_up * jnp.maximum(
        jnp.dot(w_up_ref[...], h_keep, preferred_element_type=jnp.float32),
        0.0)).astype(up_ref.dtype)

    # ---- quarter-resolution tile: res_down (1x1 conv, stride 2) ------------
    xs = xs_ref[0]                                               # (C_in, thw/4)
    hs_keep = jnp.maximum(
        jnp.maximum(jnp.dot(w_op_ref[...], xs,
                            preferred_element_type=jnp.float32), 0.0) + xs, 0.0)
    down_ref[0] = (g_down * jnp.maximum(
        jnp.dot(w_down_ref[...], hs_keep, preferred_element_type=jnp.float32),
        0.0)).astype(down_ref.dtype)


# ----------------------------------------------------------------------------
# wrapper: Cell.forward
# ----------------------------------------------------------------------------
def cell_forward(h_l1, params, flops_in_expt, flops_in_real,
                 out_dtype=jnp.float32):
    B, Cin, H, W = h_l1.shape
    assert Cin % 2 == 0, "C_in must be even (gate conv C->C/2, res_up C->C/2)"
    assert H % 2 == 0 and W % 2 == 0, "allow_down / bilinear x2 need even H, W"
    Cout = Cin                   # Identity branch of Mixed_OP requires C_in == C_out
    Cup = Cout // 2
    Chalf = Cin // 2
    G = 3                        # allow_up and allow_down -> gate_num = 3
    HW = H * W
    Hh, Wh = H // 2, W // 2
    HWq = Hh * Wh
    f32 = jnp.float32
    act_sz = jnp.dtype(out_dtype).itemsize

    # Channels-first view: free reshape of NCHW, no transpose.
    x3 = h_l1.reshape(B, Cin, HW)
    # Quarter-resolution subsample feeding res_down (stride-2 1x1 conv).
    x_sub3 = h_l1[:, :, ::2, ::2].reshape(B, Cin, HWq)

    # Tile width: multiple of 512 so the quarter-res tile (thw/4) stays a
    # multiple of 128; per-step working set counted with x2 double-buffering.
    bytes_per_col = (2 * 4 * (Cin + Cout + Cup)          # x, keep, up streams
                     + (2 * 4 * (Cin + 2 * Cout)) // 4)  # x_sub, down (quarter)
    thw = _choose_tile(HW, bytes_per_col, granule=512,
                       budget_bytes=16 * 1024 * 1024, max_cols=16384)
    n_t = pl.cdiv(HW, thw)
    HWp = n_t * thw
    thwq = thw // 4
    HWqp = n_t * thwq

    x3p = _pad_cols(x3, HWp)
    x_sub3p = _pad_cols(x_sub3, HWqp)

    # ---- gate: conv1x1+ReLU -> global avg pool -> FC -> relu(tanh) ---------
    gate3 = pl.pallas_call(
        functools.partial(gate_kernel, inv_hw=1.0 / HW),
        out_shape=jax.ShapeDtypeStruct((B, G, 1), f32),
        grid=(B, n_t),
        in_specs=[pl.BlockSpec((1, Cin, thw), lambda b, t: (b, 0, t)),
                  pl.BlockSpec((Chalf, Cin), lambda b, t: (0, 0)),
                  pl.BlockSpec((G, Chalf), lambda b, t: (0, 0)),
                  pl.BlockSpec((G, 1), lambda b, t: (0, 0))],
        out_specs=pl.BlockSpec((1, G, 1), lambda b, t: (b, 0, 0)),
        scratch_shapes=[pltpu.VMEM((Chalf, 1), f32)],
        compiler_params=pltpu.CompilerParams(
            dimension_semantics=("parallel", "arbitrary"),
            vmem_limit_bytes=48 * 1024 * 1024),
        cost_estimate=pl.CostEstimate(
            flops=int(2 * B * HWp * Cin * Chalf + 2 * B * G * Chalf),
            transcendentals=int(B * G),
            bytes_accessed=int(4 * (B * HWp * Cin + Chalf * Cin
                                    + G * Chalf + G + B * G))),
    )(x3p, params["w_gate1"], params["w_gate2"], params["b_gate2"].reshape(G, 1))

    # ---- fused main kernel: Mixed_OP + res_keep + res_up + res_down --------
    keep_p, up_p, down_p = pl.pallas_call(
        cell_kernel,
        out_shape=(jax.ShapeDtypeStruct((B, Cout, HWp), out_dtype),
                   jax.ShapeDtypeStruct((B, Cup, HWp), out_dtype),
                   jax.ShapeDtypeStruct((B, 2 * Cout, HWqp), out_dtype)),
        grid=(B, n_t),
        in_specs=[pl.BlockSpec(memory_space=pltpu.MemorySpace.SMEM),  # gate
                  pl.BlockSpec((1, Cin, thw), lambda b, t: (b, 0, t)),
                  pl.BlockSpec((1, Cin, thwq), lambda b, t: (b, 0, t)),
                  pl.BlockSpec((Cout, Cin), lambda b, t: (0, 0)),
                  pl.BlockSpec((Cup, Cout), lambda b, t: (0, 0)),
                  pl.BlockSpec((2 * Cout, Cout), lambda b, t: (0, 0))],
        out_specs=(pl.BlockSpec((1, Cout, thw), lambda b, t: (b, 0, t)),
                   pl.BlockSpec((1, Cup, thw), lambda b, t: (b, 0, t)),
                   pl.BlockSpec((1, 2 * Cout, thwq), lambda b, t: (b, 0, t))),
        compiler_params=pltpu.CompilerParams(
            dimension_semantics=("parallel", "parallel"),
            vmem_limit_bytes=48 * 1024 * 1024),
        cost_estimate=pl.CostEstimate(
            flops=int(2 * B * (HWp * Cout * (Cin + Cup)
                               + HWqp * Cout * (Cin + 2 * Cout))),
            transcendentals=0,
            bytes_accessed=int(4 * B * (HWp * Cin + HWqp * Cin)
                               + act_sz * B * (HWp * (Cout + Cup)
                                               + HWqp * 2 * Cout)
                               + 4 * (Cout * Cin + Cup * Cout
                                      + 2 * Cout * Cout + B * G))),
    )(gate3, x3p, x_sub3p, params["w_op"], params["w_up"], params["w_down"])

    keep3 = keep_p[:, :, :HW]
    up3 = up_p[:, :, :HW]
    down3 = down_p[:, :, :HWq]

    # ---- x2 bilinear upsample of the (already gated) up branch -------------
    # Two batched matmuls with the contraction landing on convenient axes.
    up4 = up3.astype(f32).reshape(B, Cup, H, W)
    Mx = bilinear_upsample_matrix(W)                   # (2W, W)
    My = bilinear_upsample_matrix(H)                   # (2H, H)
    up_w = jnp.matmul(up4, Mx.T)                       # (B, Cup, H, 2W)
    up_nchw = jnp.matmul(My, up_w).astype(out_dtype)   # (B, Cup, 2H, 2W)

    # Channels-first layout -> NCHW outputs are free reshapes (no transposes).
    keep_nchw = keep3.reshape(B, Cout, H, W)
    down_nchw = down3.reshape(B, 2 * Cout, Hh, Wh)

    # ---- flops bookkeeping (scalar glue, matches Cell.forward) -------------
    res_keep_flops = count_relu_flop(H, W, Cout)
    res_up_flops = (count_relu_flop(H, W, Cout)
                    + count_convbnrelu_flop(H, W, Cout, Cout // 2, 1))
    res_down_flops = (count_relu_flop(H, W, Cout)
                      + count_convbnrelu_flop(H, W, Cout, 2 * Cout, 1, stride=2))
    cell_flops_const = count_convbnrelu_flop(H, W, Cin, Cout, 1)   # Identity: 0
    gate_flops = (count_convbnrelu_flop(H, W, Cin, Cin // 2, 1)
                  + count_pool_flop(H, W, Cin // 2, 1, 1)
                  + count_conv_flop(1, 1, Cin // 2, G, 1))

    gate = gate3[:, :, 0]                              # (B, 3)
    g_keep = gate[:, 0].reshape(B, 1, 1, 1)
    g_up = gate[:, 1].reshape(B, 1, 1, 1)
    g_down = gate[:, 2].reshape(B, 1, 1, 1)
    g_sum = jnp.sum(gate, axis=1).reshape(B, 1, 1, 1)
    g_max = jnp.max(gate, axis=1).reshape(B, 1, 1, 1)
    gate_mask = (g_sum < 0.0001).astype(jnp.float32)

    # NOTE: as in the PyTorch module, result_list is already gated and
    # weights_list_beta returns the gates as well (same contract as Cell).
    result_list = [[up_nchw], [keep_nchw], [down_nchw]]
    weights_list_beta = [[g_up], [gate_mask * 1.0 + g_keep], [g_down]]
    trans_flops_expt = [[res_up_flops * g_up],
                        [res_keep_flops * g_keep],
                        [res_down_flops * g_down]]
    trans_flops_real = [[(g_up > 0.0001).astype(jnp.float32) * res_up_flops],
                        [(g_keep > 0.0001).astype(jnp.float32) * res_keep_flops],
                        [(g_down > 0.0001).astype(jnp.float32) * res_down_flops]]

    cell_flops = g_max * cell_flops_const
    cell_flops_real = (g_sum > 0.0001).astype(jnp.float32) * cell_flops_const
    h_l_flops = cell_flops + flops_in_expt
    h_l_flops_real = cell_flops_real + flops_in_real + gate_flops

    return (result_list, weights_list_beta, h_l_flops, h_l_flops_real,
            trans_flops_expt, trans_flops_real)


# ----------------------------------------------------------------------------
# deterministic parameter init (kaiming fan_in, gate bias = 1.5)
# Weights are stored in the PyTorch-native (C_out, C_in) layout, which is
# exactly what the channels-first matmuls consume.
# ----------------------------------------------------------------------------
def init_params(key, Cin, Cout, G=3):
    k1, k2, k3, k4, k5 = jax.random.split(key, 5)

    def kaiming(k, fan_in, shape):
        return jax.random.normal(k, shape, jnp.float32) * np.sqrt(2.0 / fan_in)

    return {
        "w_op":    kaiming(k1, Cin,      (Cout, Cin)),         # Mixed_OP conv1x1
        "w_up":    kaiming(k2, Cout,     (Cout // 2, Cout)),   # res_up conv1x1
        "w_down":  kaiming(k3, Cout,     (2 * Cout, Cout)),    # res_down conv1x1 s2
        "w_gate1": kaiming(k4, Cin,      (Cin // 2, Cin)),     # gate conv1x1
        "w_gate2": kaiming(k5, Cin // 2, (G, Cin // 2)),       # gate fc conv1x1
        "b_gate2": jnp.full((G,), 1.5, jnp.float32),           # gate_bias = 1.5
    }


# ----------------------------------------------------------------------------
if __name__ == "__main__":
    key = jax.random.PRNGKey(0)
    kx, kp = jax.random.split(key)

    B, Cin, H, W = 2, 16, 16, 16
    h_l1 = jax.random.normal(kx, (B, Cin, H, W), jnp.float32)
    params = init_params(kp, Cin, Cin)
    flops_in_expt = jnp.zeros((B, 1, 1, 1), jnp.float32)
    flops_in_real = jnp.zeros((B, 1, 1, 1), jnp.float32)

    outs = jax.jit(cell_forward)(h_l1, params, flops_in_expt, flops_in_real)

    for leaf in jax.tree_util.tree_leaves(outs):
        jax.block_until_ready(leaf)
    print("KERNEL_OK")
</pallas_src>

<mosaic_0001>
module attributes {stable_mosaic.version = 11 : i64} {
  func.func @gate_kernel(%arg0: i32, %arg1: i32, %arg2: memref<1x16x512xf32, #tpu.memory_space<vmem>>, %arg3: memref<8x16xf32, #tpu.memory_space<vmem>>, %arg4: memref<3x8xf32, #tpu.memory_space<vmem>>, %arg5: memref<3x1xf32, #tpu.memory_space<vmem>>, %arg6: memref<1x3x1xf32, #tpu.memory_space<vmem>>, %arg7: memref<8x1xf32, #tpu.memory_space<vmem>>) attributes {dimension_semantics = [#tpu.dimension_semantics<parallel>, #tpu.dimension_semantics<arbitrary>], iteration_bounds = array<i64: 2, 1>, scalar_prefetch = 0 : i64, scratch_operands = 1 : i64, tpu.core_type = #tpu.core_type<tc>, window_params = [{transform_indices = @transform_0, window_bounds = array<i64: 1, 16, 512>}, {pipeline_mode = #tpu.pipeline_mode<synchronous>, transform_indices = @transform_1, window_bounds = array<i64: 8, 16>}, {pipeline_mode = #tpu.pipeline_mode<synchronous>, transform_indices = @transform_2, window_bounds = array<i64: 3, 8>}, {pipeline_mode = #tpu.pipeline_mode<synchronous>, transform_indices = @transform_3, window_bounds = array<i64: 3, 1>}, {transform_indices = @transform_4, window_bounds = array<i64: 1, 3, 1>}]} {
    %c0_i32 = arith.constant 0 : i32
    %0 = arith.cmpi eq, %arg1, %c0_i32 : i32
    %1 = arith.extui %0 : i1 to i32
    %c0_i32_0 = arith.constant 0 : i32
    %2 = arith.cmpi ne, %1, %c0_i32_0 : i32
    scf.if %2 {
      %cst_13 = arith.constant 0.000000e+00 : f32
      %17 = vector.broadcast %cst_13 : f32 to vector<8x1xf32>
      %c0_14 = arith.constant 0 : index
      %c0_15 = arith.constant 0 : index
      %18 = vector.load %arg7[%c0_14, %c0_15] : memref<8x1xf32, #tpu.memory_space<vmem>>, vector<8x1xf32>
      tpu.vector_store %arg7[%c0_14, %c0_15], %17 {strides = array<i32>} : memref<8x1xf32, #tpu.memory_space<vmem>>, vector<8x1xf32>,
    } else {
    }
    %c0 = arith.constant 0 : index
    %c0_1 = arith.constant 0 : index
    %3 = vector.load %arg3[%c0, %c0_1] : memref<8x16xf32, #tpu.memory_space<vmem>>, vector<8x16xf32>
    %c0_2 = arith.constant 0 : index
    %c0_3 = arith.constant 0 : index
    %c0_4 = arith.constant 0 : index
    %4 = vector.load %arg2[%c0_2, %c0_3, %c0_4] : memref<1x16x512xf32, #tpu.memory_space<vmem>>, vector<1x16x512xf32>
    %5 = vector.shape_cast %4 : vector<1x16x512xf32> to vector<16x512xf32>
    %cst = arith.constant dense<0.000000e+00> : vector<8x512xf32>
    %6 = tpu.matmul %3, %5, %cst {dimension_numbers = #tpu.dot_dimension_numbers<[1], [0], [0], [1], [0, 0, 1, 1], [], []>} : vector<8x16xf32>, vector<16x512xf32>, vector<8x512xf32> -> vector<8x512xf32>
    %cst_5 = arith.constant 0.000000e+00 : f32
    %7 = vector.broadcast %cst_5 : f32 to vector<8x512xf32>
    %8 = arith.maximumf %6, %7 : vector<8x512xf32>
    %c0_6 = arith.constant 0 : index
    %c0_7 = arith.constant 0 : index
    %9 = vector.load %arg7[%c0_6, %c0_7] : memref<8x1xf32, #tpu.memory_space<vmem>>, vector<8x1xf32>
    %cst_8 = arith.constant dense<0.000000e+00> : vector<8xf32>
    %10 = vector.multi_reduction <add>, %8, %cst_8 [1] : vector<8x512xf32> to vector<8xf32>
    %11 = vector.shape_cast %10 : vector<8xf32> to vector<8x1xf32>
    %12 = arith.addf %9, %11 : vector<8x1xf32>
    %c0_9 = arith.constant 0 : index
    %c0_10 = arith.constant 0 : index
    %13 = vector.load %arg7[%c0_9, %c0_10] : memref<8x1xf32, #tpu.memory_space<vmem>>, vector<8x1xf32>
    tpu.vector_store %arg7[%c0_9, %c0_10], %12 {strides = array<i32>} : memref<8x1xf32, #tpu.memory_space<vmem>>, vector<8x1xf32>,
    %c0_i32_11 = arith.constant 0 : i32
    %14 = arith.cmpi eq, %arg1, %c0_i32_11 : i32
    %15 = arith.extui %14 : i1 to i32
    %c0_i32_12 = arith.constant 0 : i32
    %16 = arith.cmpi ne, %15, %c0_i32_12 : i32
    scf.if %16 {
      %c0_13 = arith.constant 0 : index
      %c0_14 = arith.constant 0 : index
      %17 = vector.load %arg7[%c0_13, %c0_14] : memref<8x1xf32, #tpu.memory_space<vmem>>, vector<8x1xf32>
      %cst_15 = arith.constant 3.906250e-03 : f32
      %18 = vector.broadcast %cst_15 : f32 to vector<8x1xf32>
      %19 = arith.mulf %17, %18 : vector<8x1xf32>
      %c0_16 = arith.constant 0 : index
      %c0_17 = arith.constant 0 : index
      %20 = vector.load %arg4[%c0_16, %c0_17] : memref<3x8xf32, #tpu.memory_space<vmem>>, vector<3x8xf32>
      %cst_18 = arith.constant dense<0.000000e+00> : vector<3x1xf32>
      %21 = tpu.matmul %20, %19, %cst_18 {dimension_numbers = #tpu.dot_dimension_numbers<[1], [0], [0], [1], [0, 0, 1, 1], [], []>} : vector<3x8xf32>, vector<8x1xf32>, vector<3x1xf32> -> vector<3x1xf32>
      %c0_19 = arith.constant 0 : index
      %c0_20 = arith.constant 0 : index
      %22 = vector.load %arg5[%c0_19, %c0_20] : memref<3x1xf32, #tpu.memory_space<vmem>>, vector<3x1xf32>
      %23 = arith.addf %21, %22 : vector<3x1xf32>
      %24 = math.tanh %23 : vector<3x1xf32>
      %cst_21 = arith.constant 0.000000e+00 : f32
      %25 = vector.broadcast %cst_21 : f32 to vector<3x1xf32>
      %26 = arith.maximumf %24, %25 : vector<3x1xf32>
      %c0_22 = arith.constant 0 : index
      %c0_23 = arith.constant 0 : index
      %c0_24 = arith.constant 0 : index
      %27 = vector.load %arg6[%c0_22, %c0_23, %c0_24] : memref<1x3x1xf32, #tpu.memory_space<vmem>>, vector<1x3x1xf32>
      %28 = vector.shape_cast %27 : vector<1x3x1xf32> to vector<3x1xf32>
      %29 = vector.shape_cast %26 : vector<3x1xf32> to vector<1x3x1xf32>
      tpu.vector_store %arg6[%c0_22, %c0_23, %c0_24], %29 {strides = array<i32>} : memref<1x3x1xf32, #tpu.memory_space<vmem>>, vector<1x3x1xf32>,
    } else {
    }
    return
  }
  func.func @transform_0(%arg0: i32, %arg1: i32) -> (i32, i32, i32) {
    %c0_i32 = arith.constant 0 : i32
    %c0_i32_0 = arith.constant 0 : i32
    return %arg0, %c0_i32, %arg1 : i32, i32, i32
  }
  func.func @transform_1(%arg0: i32, %arg1: i32) -> (i32, i32) {
    %c0_i32 = arith.constant 0 : i32
    %c0_i32_0 = arith.constant 0 : i32
    %c0_i32_1 = arith.constant 0 : i32
    return %c0_i32, %c0_i32_0 : i32, i32
  }
  func.func @transform_2(%arg0: i32, %arg1: i32) -> (i32, i32) {
    %c0_i32 = arith.constant 0 : i32
    %c0_i32_0 = arith.constant 0 : i32
    %c0_i32_1 = arith.constant 0 : i32
    return %c0_i32, %c0_i32_0 : i32, i32
  }
  func.func @transform_3(%arg0: i32, %arg1: i32) -> (i32, i32) {
    %c0_i32 = arith.constant 0 : i32
    %c0_i32_0 = arith.constant 0 : i32
    %c0_i32_1 = arith.constant 0 : i32
    return %c0_i32, %c0_i32_0 : i32, i32
  }
  func.func @transform_4(%arg0: i32, %arg1: i32) -> (i32, i32, i32) {
    %c0_i32 = arith.constant 0 : i32
    %c0_i32_0 = arith.constant 0 : i32
    %c0_i32_1 = arith.constant 0 : i32
    return %arg0, %c0_i32, %c0_i32_0 : i32, i32, i32
  }
}

module attributes {stable_mosaic.version = 11 : i64} {
  func.func @cell_kernel(%arg0: i32, %arg1: i32, %arg2: memref<2x3x1xf32, #tpu.memory_space<smem>>, %arg3: memref<1x16x512xf32, #tpu.memory_space<vmem>>, %arg4: memref<1x16x128xf32, #tpu.memory_space<vmem>>, %arg5: memref<16x16xf32, #tpu.memory_space<vmem>>, %arg6: memref<8x16xf32, #tpu.memory_space<vmem>>, %arg7: memref<32x16xf32, #tpu.memory_space<vmem>>, %arg8: memref<1x16x512xf32, #tpu.memory_space<vmem>>, %arg9: memref<1x8x512xf32, #tpu.memory_space<vmem>>, %arg10: memref<1x32x128xf32, #tpu.memory_space<vmem>>) attributes {dimension_semantics = [#tpu.dimension_semantics<parallel>, #tpu.dimension_semantics<parallel>], iteration_bounds = array<i64: 2, 1>, scalar_prefetch = 0 : i64, scratch_operands = 0 : i64, tpu.core_type = #tpu.core_type<tc>, window_params = [{transform_indices = @transform_0, window_bounds = array<i64: 2, 3, 1>}, {transform_indices = @transform_1, window_bounds = array<i64: 1, 16, 512>}, {transform_indices = @transform_2, window_bounds = array<i64: 1, 16, 128>}, {pipeline_mode = #tpu.pipeline_mode<synchronous>, transform_indices = @transform_3, window_bounds = array<i64: 16, 16>}, {pipeline_mode = #tpu.pipeline_mode<synchronous>, transform_indices = @transform_4, window_bounds = array<i64: 8, 16>}, {pipeline_mode = #tpu.pipeline_mode<synchronous>, transform_indices = @transform_5, window_bounds = array<i64: 32, 16>}, {transform_indices = @transform_6, window_bounds = array<i64: 1, 16, 512>}, {transform_indices = @transform_7, window_bounds = array<i64: 1, 8, 512>}, {transform_indices = @transform_8, window_bounds = array<i64: 1, 32, 128>}]} {
    %0 = arith.index_cast %arg0 : i32 to index
    %c0 = arith.constant 0 : index
    %c0_0 = arith.constant 0 : index
    %1 = memref.load %arg2[%0, %c0, %c0_0] : memref<2x3x1xf32, #tpu.memory_space<smem>>
    %2 = arith.index_cast %arg0 : i32 to index
    %c1 = arith.constant 1 : index
    %c0_1 = arith.constant 0 : index
    %3 = memref.load %arg2[%2, %c1, %c0_1] : memref<2x3x1xf32, #tpu.memory_space<smem>>
    %4 = arith.index_cast %arg0 : i32 to index
    %c2 = arith.constant 2 : index
    %c0_2 = arith.constant 0 : index
    %5 = memref.load %arg2[%4, %c2, %c0_2] : memref<2x3x1xf32, #tpu.memory_space<smem>>
    %6 = arith.addf %1, %3 : f32
    %7 = arith.addf %6, %5 : f32
    %cst = arith.constant 9.99999974E-5 : f32
    %8 = arith.cmpf olt, %7, %cst : f32
    %9 = arith.extui %8 : i1 to i32
    %10 = arith.sitofp %9 : i32 to f32
    %c0_3 = arith.constant 0 : index
    %c0_4 = arith.constant 0 : index
    %c0_5 = arith.constant 0 : index
    %11 = vector.load %arg3[%c0_3, %c0_4, %c0_5] : memref<1x16x512xf32, #tpu.memory_space<vmem>>, vector<1x16x512xf32>
    %12 = vector.shape_cast %11 : vector<1x16x512xf32> to vector<16x512xf32>
    %c0_6 = arith.constant 0 : index
    %c0_7 = arith.constant 0 : index
    %13 = vector.load %arg5[%c0_6, %c0_7] : memref<16x16xf32, #tpu.memory_space<vmem>>, vector<16x16xf32>
    %cst_8 = arith.constant dense<0.000000e+00> : vector<16x512xf32>
    %14 = tpu.matmul %13, %12, %cst_8 {dimension_numbers = #tpu.dot_dimension_numbers<[1], [0], [0], [1], [0, 0, 1, 1], [], []>} : vector<16x16xf32>, vector<16x512xf32>, vector<16x512xf32> -> vector<16x512xf32>
    %cst_9 = arith.constant 0.000000e+00 : f32
    %15 = vector.broadcast %cst_9 : f32 to vector<16x512xf32>
    %16 = arith.maximumf %14, %15 : vector<16x512xf32>
    %17 = arith.addf %16, %12 : vector<16x512xf32>
    %cst_10 = arith.constant 0.000000e+00 : f32
    %18 = vector.broadcast %cst_10 : f32 to vector<16x512xf32>
    %19 = arith.maximumf %17, %18 : vector<16x512xf32>
    %20 = vector.broadcast %10 : f32 to vector<16x512xf32>
    %21 = arith.mulf %20, %12 : vector<16x512xf32>
    %22 = vector.broadcast %1 : f32 to vector<16x512xf32>
    %23 = arith.mulf %22, %19 : vector<16x512xf32>
    %24 = arith.addf %21, %23 : vector<16x512xf32>
    %c0_11 = arith.constant 0 : index
    %c0_12 = arith.constant 0 : index
    %c0_13 = arith.constant 0 : index
    %25 = vector.load %arg8[%c0_11, %c0_12, %c0_13] : memref<1x16x512xf32, #tpu.memory_space<vmem>>, vector<1x16x512xf32>
    %26 = vector.shape_cast %25 : vector<1x16x512xf32> to vector<16x512xf32>
    %27 = vector.shape_cast %24 : vector<16x512xf32> to vector<1x16x512xf32>
    tpu.vector_store %arg8[%c0_11, %c0_12, %c0_13], %27 {strides = array<i32>} : memref<1x16x512xf32, #tpu.memory_space<vmem>>, vector<1x16x512xf32>,
    %c0_14 = arith.constant 0 : index
    %c0_15 = arith.constant 0 : index
    %28 = vector.load %arg6[%c0_14, %c0_15] : memref<8x16xf32, #tpu.memory_space<vmem>>, vector<8x16xf32>
    %cst_16 = arith.constant dense<0.000000e+00> : vector<8x512xf32>
    %29 = tpu.matmul %28, %19, %cst_16 {dimension_numbers = #tpu.dot_dimension_numbers<[1], [0], [0], [1], [0, 0, 1, 1], [], []>} : vector<8x16xf32>, vector<16x512xf32>, vector<8x512xf32> -> vector<8x512xf32>
    %cst_17 = arith.constant 0.000000e+00 : f32
    %30 = vector.broadcast %cst_17 : f32 to vector<8x512xf32>
    %31 = arith.maximumf %29, %30 : vector<8x512xf32>
    %32 = vector.broadcast %3 : f32 to vector<8x512xf32>
    %33 = arith.mulf %32, %31 : vector<8x512xf32>
    %c0_18 = arith.constant 0 : index
    %c0_19 = arith.constant 0 : index
    %c0_20 = arith.constant 0 : index
    %34 = vector.load %arg9[%c0_18, %c0_19, %c0_20] : memref<1x8x512xf32, #tpu.memory_space<vmem>>, vector<1x8x512xf32>
    %35 = vector.shape_cast %34 : vector<1x8x512xf32> to vector<8x512xf32>
    %36 = vector.shape_cast %33 : vector<8x512xf32> to vector<1x8x512xf32>
    tpu.vector_store %arg9[%c0_18, %c0_19, %c0_20], %36 {strides = array<i32>} : memref<1x8x512xf32, #tpu.memory_space<vmem>>, vector<1x8x512xf32>,
    %c0_21 = arith.constant 0 : index
    %c0_22 = arith.constant 0 : index
    %c0_23 = arith.constant 0 : index
    %37 = vector.load %arg4[%c0_21, %c0_22, %c0_23] : memref<1x16x128xf32, #tpu.memory_space<vmem>>, vector<1x16x128xf32>
    %38 = vector.shape_cast %37 : vector<1x16x128xf32> to vector<16x128xf32>
    %c0_24 = arith.constant 0 : index
    %c0_25 = arith.constant 0 : index
    %39 = vector.load %arg5[%c0_24, %c0_25] : memref<16x16xf32, #tpu.memory_space<vmem>>, vector<16x16xf32>
    %cst_26 = arith.constant dense<0.000000e+00> : vector<16x128xf32>
    %40 = tpu.matmul %39, %38, %cst_26 {dimension_numbers = #tpu.dot_dimension_numbers<[1], [0], [0], [1], [0, 0, 1, 1], [], []>} : vector<16x16xf32>, vector<16x128xf32>, vector<16x128xf32> -> vector<16x128xf32>
    %cst_27 = arith.constant 0.000000e+00 : f32
    %41 = vector.broadcast %cst_27 : f32 to vector<16x128xf32>
    %42 = arith.maximumf %40, %41 : vector<16x128xf32>
    %43 = arith.addf %42, %38 : vector<16x128xf32>
    %cst_28 = arith.constant 0.000000e+00 : f32
    %44 = vector.broadcast %cst_28 : f32 to vector<16x128xf32>
    %45 = arith.maximumf %43, %44 : vector<16x128xf32>
    %c0_29 = arith.constant 0 : index
    %c0_30 = arith.constant 0 : index
    %46 = vector.load %arg7[%c0_29, %c0_30] : memref<32x16xf32, #tpu.memory_space<vmem>>, vector<32x16xf32>
    %cst_31 = arith.constant dense<0.000000e+00> : vector<32x128xf32>
    %47 = tpu.matmul %46, %45, %cst_31 {dimension_numbers = #tpu.dot_dimension_numbers<[1], [0], [0], [1], [0, 0, 1, 1], [], []>} : vector<32x16xf32>, vector<16x128xf32>, vector<32x128xf32> -> vector<32x128xf32>
    %cst_32 = arith.constant 0.000000e+00 : f32
    %48 = vector.broadcast %cst_32 : f32 to vector<32x128xf32>
    %49 = arith.maximumf %47, %48 : vector<32x128xf32>
    %50 = vector.broadcast %5 : f32 to vector<32x128xf32>
    %51 = arith.mulf %50, %49 : vector<32x128xf32>
    %c0_33 = arith.constant 0 : index
    %c0_34 = arith.constant 0 : index
    %c0_35 = arith.constant 0 : index
    %52 = vector.load %arg10[%c0_33, %c0_34, %c0_35] : memref<1x32x128xf32, #tpu.memory_space<vmem>>, vector<1x32x128xf32>
    %53 = vector.shape_cast %52 : vector<1x32x128xf32> to vector<32x128xf32>
    %54 = vector.shape_cast %51 : vector<32x128xf32> to vector<1x32x128xf32>
    tpu.vector_store %arg10[%c0_33, %c0_34, %c0_35], %54 {strides = array<i32>} : memref<1x32x128xf32, #tpu.memory_space<vmem>>, vector<1x32x128xf32>,
    return
  }
  func.func @transform_0(%arg0: i32, %arg1: i32) -> (i32, i32, i32) {
    %c0_i32 = arith.constant 0 : i32
    %c0_i32_0 = arith.constant 0 : i32
    %c0_i32_1 = arith.constant 0 : i32
    %c0_i32_2 = arith.constant 0 : i32
    return %c0_i32, %c0_i32_0, %c0_i32_1 : i32, i32, i32
  }
  func.func @transform_1(%arg0: i32, %arg1: i32) -> (i32, i32, i32) {
    %c0_i32 = arith.constant 0 : i32
    %c0_i32_0 = arith.constant 0 : i32
    return %arg0, %c0_i32, %arg1 : i32, i32, i32
  }
  func.func @transform_2(%arg0: i32, %arg1: i32) -> (i32, i32, i32) {
    %c0_i32 = arith.constant 0 : i32
    %c0_i32_0 = arith.constant 0 : i32
    return %arg0, %c0_i32, %arg1 : i32, i32, i32
  }
  func.func @transform_3(%arg0: i32, %arg1: i32) -> (i32, i32) {
    %c0_i32 = arith.constant 0 : i32
    %c0_i32_0 = arith.constant 0 : i32
    %c0_i32_1 = arith.constant 0 : i32
    return %c0_i32, %c0_i32_0 : i32, i32
  }
  func.func @transform_4(%arg0: i32, %arg1: i32) -> (i32, i32) {
    %c0_i32 = arith.constant 0 : i32
    %c0_i32_0 = arith.constant 0 : i32
    %c0_i32_1 = arith.constant 0 : i32
    return %c0_i32, %c0_i32_0 : i32, i32
  }
  func.func @transform_5(%arg0: i32, %arg1: i32) -> (i32, i32) {
    %c0_i32 = arith.constant 0 : i32
    %c0_i32_0 = arith.constant 0 : i32
    %c0_i32_1 = arith.constant 0 : i32
    return %c0_i32, %c0_i32_0 : i32, i32
  }
  func.func @transform_6(%arg0: i32, %arg1: i32) -> (i32, i32, i32) {
    %c0_i32 = arith.constant 0 : i32
    %c0_i32_0 = arith.constant 0 : i32
    return %arg0, %c0_i32, %arg1 : i32, i32, i32
  }
  func.func @transform_7(%arg0: i32, %arg1: i32) -> (i32, i32, i32) {
    %c0_i32 = arith.constant 0 : i32
    %c0_i32_0 = arith.constant 0 : i32
    return %arg0, %c0_i32, %arg1 : i32, i32, i32
  }
  func.func @transform_8(%arg0: i32, %arg1: i32) -> (i32, i32, i32) {
    %c0_i32 = arith.constant 0 : i32
    %c0_i32_0 = arith.constant 0 : i32
    return %arg0, %c0_i32, %arg1 : i32, i32, i32
  }
}

</mosaic_0001>

<llo_original>
// kernel: cell_forward.2
$region0: #{cell_forward.2}
  #allocation0 [shape = 'u32[]', space=smem, size = 0x4, offset = 0x4, fixed_abs, tag = 'smem constant byte address 0x4 - core index']
  #allocation1 [shape = 'u32[144,128]{1,0:T(1,128)}', space=vmem, size = 0x12000, scoped, tag = 'internal scratch']
  #allocation2 [shape = 'f32[8,1]{1,0:T(8,128)}', space=vmem, size = 0x1000, scoped, tag = 'scratch operand']
  %s0 = inlined_call_operand.vmem [shape: f32[2,16,512], index: 0, kind: input, shape index: {}]
  %s1 = inlined_call_operand.vmem [shape: f32[8,16], index: 1, kind: input, shape index: {}]
  %s2 = inlined_call_operand.vmem [shape: f32[3,8], index: 2, kind: input, shape index: {}]
  %s3 = inlined_call_operand.vmem [shape: f32[3,1], index: 3, kind: input, shape index: {}]
  %s4 = inlined_call_operand.vmem [shape: f32[2,3,1], index: 4, kind: output, shape index: {}]
  %s5 = sld [smem:[#allocation0]]
  $region57: #{cell_forward.2} parent=0
    _
  %s7 = ssub.s32 1, %s5
  %s8 = scalar_select 0, %s7, %s5
  loop: start=0, step=1, limit=4
  $region2: #{cell_forward.2} parent=0 // loop_pre_header
    _
  $region3: #{cell_forward.2} parent=0 // loop_header
    %s10 = sphi 0, %s14
    %p11 = scmp.ge.s32.totalorder %s10, 4
    %s17 = sphi 0, %s29
    %s18 = sphi 0, %s25
    %s19 = sphi 0, %s17
    %s20 = sphi 0, %s18
    %s21 = sphi 0, %s19
    %s22 = sphi 0, %s20
    %s34 = sphi 0, %s36
    %s37 = sphi 0, %s34
    %s38 = sphi 0, %s37
    %s54 = sphi 0, %s38
    %s58 = sphi 0, %s58
    %s60 = sphi 0, %s58
    %s61 = sphi 0, %s60
    %s75 = sphi 0, %s61
    %s79 = sphi 0, %s79
    %s81 = sphi 0, %s79
    %s82 = sphi 0, %s81
    %s96 = sphi 0, %s82
    %s100 = sphi 0, %s100
    %s102 = sphi 0, %s100
    %s103 = sphi 0, %s102
    %s117 = sphi 0, %s103
    %s123 = sphi 0, %s125
    %s126 = sphi 0, %s123
    %s127 = sphi 0, %s126
    %s143 = sphi 0, %s127
  $region4: #{cell_forward.2} parent=0 // loop_header_branch
    %13 = sbr.rel (%p11) target = $region8
  $region5: #{cell_forward.2} parent=0 // loop_body
    %s15 = ssub.s32 %s10, 1
    %s16 = ssub.s32 %s10, 2
    %s23 = sadd.s32 1, %s18
    %p24 = scmp.ge.s32.totalorder %s23, 1
    %s25 = scalar_select %p24, 0, %s23
    %s26 = sadd.s32 1, %s17
    %s27 = scalar_select %p24, %s26, %s17
    %p28 = scmp.ge.s32.totalorder %s27, 2
    %s29 = scalar_select %p28, 0, %s27
    %s30 = ssub.s32 %s17, %s29
    %s31 = ssub.s32 %s18, %s25
    %s32 = sor.u32 %s30, %s31
    %p33 = scmp.eq.s32.totalorder %s32, 0
    %s35 = sadd.s32 %s34, 1
    %s36 = scalar_select %p33, %s34, %s35
    %p39 = pneg %p33
    %p40 = scmp.eq.s32.totalorder %s10, 1
    %p41 = por %p39, %p40
    %p42 = scmp.ne.s32.totalorder %s34, %s37
    %p43 = scmp.eq.s32.totalorder %s10, 0
    %p44 = por %p42, %p43
    %p45 = scmp.ne.s32.totalorder %s34, %s37
    %p46 = scmp.eq.s32.totalorder %s15, 1
    %p47 = por %p45, %p46
    %p48 = scmp.ne.s32.totalorder %s37, %s38
    %p49 = scmp.eq.s32.totalorder %s15, 0
    %p50 = por %p48, %p49
    %p51 = scmp.ne.s32.totalorder %s37, %s38
    %p52 = scmp.eq.s32.totalorder %s16, 1
    %p53 = por %p51, %p52
    %p55 = scmp.ne.s32.totalorder %s38, %s54
    %p56 = scmp.eq.s32.totalorder %s16, 0
    %p57 = por %p55, %p56
    %s59 = sadd.s32 %s58, 1
    %p62 = scmp.eq.s32.totalorder %s10, 1
    %p63 = scmp.ne.s32.totalorder %s58, %s60
    %p64 = scmp.eq.s32.totalorder %s10, 0
    %p65 = por %p63, %p64
    %p66 = scmp.ne.s32.totalorder %s58, %s60
    %p67 = scmp.eq.s32.totalorder %s15, 1
    %p68 = por %p66, %p67
    %p69 = scmp.ne.s32.totalorder %s60, %s61
    %p70 = scmp.eq.s32.totalorder %s15, 0
    %p71 = por %p69, %p70
    %p72 = scmp.ne.s32.totalorder %s60, %s61
    %p73 = scmp.eq.s32.totalorder %s16, 1
    %p74 = por %p72, %p73
    %p76 = scmp.ne.s32.totalorder %s61, %s75
    %p77 = scmp.eq.s32.totalorder %s16, 0
    %p78 = por %p76, %p77
    %s80 = sadd.s32 %s79, 1
    %p83 = scmp.eq.s32.totalorder %s10, 1
    %p84 = scmp.ne.s32.totalorder %s79, %s81
    %p85 = scmp.eq.s32.totalorder %s10, 0
    %p86 = por %p84, %p85
    %p87 = scmp.ne.s32.totalorder %s79, %s81
    %p88 = scmp.eq.s32.totalorder %s15, 1
    %p89 = por %p87, %p88
    %p90 = scmp.ne.s32.totalorder %s81, %s82
    %p91 = scmp.eq.s32.totalorder %s15, 0
    %p92 = por %p90, %p91
    %p93 = scmp.ne.s32.totalorder %s81, %s82
    %p94 = scmp.eq.s32.totalorder %s16, 1
    %p95 = por %p93, %p94
    %p97 = scmp.ne.s32.totalorder %s82, %s96
    %p98 = scmp.eq.s32.totalorder %s16, 0
    %p99 = por %p97, %p98
    %s101 = sadd.s32 %s100, 1
    %p104 = scmp.eq.s32.totalorder %s10, 1
    %p105 = scmp.ne.s32.totalorder %s100, %s102
    %p106 = scmp.eq.s32.totalorder %s10, 0
    %p107 = por %p105, %p106
    %p108 = scmp.ne.s32.totalorder %s100, %s102
    %p109 = scmp.eq.s32.totalorder %s15, 1
    %p110 = por %p108, %p109
    %p111 = scmp.ne.s32.totalorder %s102, %s103
    %p112 = scmp.eq.s32.totalorder %s15, 0
    %p113 = por %p111, %p112
    %p114 = scmp.ne.s32.totalorder %s102, %s103
    %p115 = scmp.eq.s32.totalorder %s16, 1
    %p116 = por %p114, %p115
    %p118 = scmp.ne.s32.totalorder %s103, %s117
    %p119 = scmp.eq.s32.totalorder %s16, 0
    %p120 = por %p118, %p119
    %s121 = ssub.s32 %s17, %s29
    %p122 = scmp.eq.s32.totalorder %s121, 0
    %s124 = sadd.s32 %s123, 1
    %s125 = scalar_select %p122, %s123, %s124
    %p128 = pneg %p122
    %p129 = scmp.eq.s32.totalorder %s10, 1
    %p130 = por %p128, %p129
    %p131 = scmp.ne.s32.totalorder %s123, %s126
    %p132 = scmp.eq.s32.totalorder %s10, 0
    %p133 = por %p131, %p132
    %p134 = scmp.ne.s32.totalorder %s123, %s126
    %p135 = scmp.eq.s32.totalorder %s15, 1
    %p136 = por %p134, %p135
    %p137 = scmp.ne.s32.totalorder %s126, %s127
    %p138 = scmp.eq.s32.totalorder %s15, 0
    %p139 = por %p137, %p138
    %p140 = scmp.ne.s32.totalorder %s126, %s127
    %p141 = scmp.eq.s32.totalorder %s16, 1
    %p142 = por %p140, %p141
    %p144 = scmp.ne.s32.totalorder %s127, %s143
    %p145 = scmp.eq.s32.totalorder %s16, 0
    %p146 = por %p144, %p145
    %p147 = scmp.le.s32.totalorder 1, %s10
    %p148 = scmp.lt.s32.totalorder %s10, 3
    %p149 = pnand %p147, %p148
    %p150 = pneg %p149
    // Predicated region
    $region9: #{cell_forward.2} parent=5 // pred_check
      _
    $region10: #{cell_forward.2} parent=5 // pred_check_branch
      %152 = sbr.rel (%p149) target = $region12
    $region11: #{cell_forward.2} parent=5 // pred_region
      %s153 = ssub.s32 %s10, 1
      // Predicated region
      $region13: #{cell_forward.2} parent=11 // pred_check
        %p154 = pneg %p71
      $region14: #{cell_forward.2} parent=11 // pred_check_branch
        %156 = sbr.rel (%p154) target = $region16
      $region15: #{cell_forward.2} parent=11 // pred_region
        _
      $region16: #{cell_forward.2} parent=11 // pred_fallthru
        _
      // Predicated region
      $region17: #{cell_forward.2} parent=11 // pred_check
        %p157 = pneg %p92
      $region18: #{cell_forward.2} parent=11 // pred_check_branch
        %159 = sbr.rel (%p157) target = $region20
      $region19: #{cell_forward.2} parent=11 // pred_region
        _
      $region20: #{cell_forward.2} parent=11 // pred_fallthru
        _
      // Predicated region
      $region21: #{cell_forward.2} parent=11 // pred_check
        %p160 = pneg %p113
      $region22: #{cell_forward.2} parent=11 // pred_check_branch
        %162 = sbr.rel (%p160) target = $region24
      $region23: #{cell_forward.2} parent=11 // pred_region
        _
      $region24: #{cell_forward.2} parent=11 // pred_fallthru
        _
    $region12: #{cell_forward.2} parent=5 // pred_fallthru
      _
    %p163 = scmp.lt.s32.totalorder %s10, 2
    // Predicated region
    $region25: #{cell_forward.2} parent=5 // pred_check
      %p164 = pneg %p163
    $region26: #{cell_forward.2} parent=5 // pred_check_branch
      %166 = sbr.rel (%p164) target = $region28
    $region27: #{cell_forward.2} parent=5 // pred_region
      // Predicated region
      $region29: #{cell_forward.2} parent=27 // pred_check
        %p167 = pneg %p44
      $region30: #{cell_forward.2} parent=27 // pred_check_branch
        %169 = sbr.rel (%p167) target = $region32
      $region31: #{cell_forward.2} parent=27 // pred_region
        %s170 = smul.u32 4, %s18
        %p171 = scmp.lt.s32.totalorder %s17, 1
        %s172 = scalar_select %p171, %s17, 1
        %p173 = scmp.lt.s32.totalorder %s170, 3
        %s174 = scalar_select %p173, %s170, 3
        %s175 = smul.addr %s172, 8
        %s176 = sadd.s32 %s174, %s175
        %s177 = smul.addr %s176, 8
        %s178 = scalar_lea.vmem %s0, %s177
        %s179 = smul.u32 4, %s18
      $region32: #{cell_forward.2} parent=27 // pred_fallthru
        _
    $region28: #{cell_forward.2} parent=5 // pred_fallthru
      _
    %p180 = scmp.le.s32.totalorder 1, %s10
    %p181 = scmp.lt.s32.totalorder %s10, 3
    %p182 = pnand %p180, %p181
    %p183 = pneg %p182
    // Predicated region
    $region33: #{cell_forward.2} parent=5 // pred_check
      _
    $region34: #{cell_forward.2} parent=5 // pred_check_branch
      %185 = sbr.rel (%p182) target = $region36
    $region35: #{cell_forward.2} parent=5 // pred_region
      %s186 = ssub.s32 %s10, 1
      %s187 = smul.u32 4, %s20
      %p188 = scmp.lt.s32.totalorder %s19, 1
      %s189 = scalar_select %p188, %s19, 1
      %p190 = scmp.lt.s32.totalorder %s187, 3
      %s191 = scalar_select %p190, %s187, 3
      %s192 = smul.addr %s189, 8
      %s193 = sadd.s32 %s191, %s192
      %s194 = smul.addr %s193, 8
      %s195 = scalar_lea.vmem %s0, %s194
      %p196 = pneg %p50
      %p197 = pneg %p47
      %p198 = pneg %p71
      %p199 = pneg %p68
      %p200 = pneg %p92
      %p201 = pneg %p89
      %p202 = pneg %p113
      %p203 = pneg %p110
      %p204 = pneg %p139
      %p205 = pneg %p136
      %p206 = scmp.lt.s32.totalorder %s19, 1
      %s207 = scalar_select %p206, %s19, 1
      %s208 = smul.addr %s207, 4
      %s209 = scalar_lea.vmem %s4, %s208
      %s210 = smul.u32 4, %s20
      %p211 = scmp.lt.s32.totalorder %s19, 1
      %s212 = scalar_select %p211, %s19, 1
      %p213 = scmp.lt.s32.totalorder %s210, 3
      %s214 = scalar_select %p213, %s210, 3
      %s215 = smul.addr %s212, 8
      %s216 = sadd.s32 %s214, %s215
      %s217 = smul.addr %s216, 8
      %s218 = scalar_lea.vmem %s0, %s217
      %s219 = smul.u32 4, %s20
      %p220 = scmp.lt.s32.totalorder %s19, 1
      %s221 = scalar_select %p220, %s19, 1
      %s222 = smul.addr %s221, 4
      %s223 = scalar_lea.vmem %s4, %s222
      %p224 = scmp.eq.s32.totalorder %s20, 0
      // Predicated region
      $region37: #{cell_forward.2} parent=35 // pred_check
        %p225 = pneg %p224
      $region38: #{cell_forward.2} parent=35 // pred_check_branch
        %227 = sbr.rel (%p225) target = $region40
      $region39: #{cell_forward.2} parent=35 // pred_region
        %vm228 = vcmask 7168
        %229 = vst.msk [vmem:[#allocation2] sm:$0xff] %vm228, 0.0
      $region40: #{cell_forward.2} parent=35 // pred_fallthru
        _
      %v230 = vld [vmem:[%s1] sm:$0xff]
      %v231 = vld [vmem:[%s218] sm:$0xff]
      %v232 = vld [vmem:[%s218 + $0x8] sm:$0xff]
      %v233 = vld [vmem:[%s218 + $0x10] sm:$0xff]
      %v234 = vld [vmem:[%s218 + $0x18] sm:$0xff]
      %v235 = vld [vmem:[%s218 + $0x20] sm:$0xff]
      %v236 = vld [vmem:[%s218 + $0x28] sm:$0xff]
      %v237 = vld [vmem:[%s218 + $0x30] sm:$0xff]
      %v238 = vld [vmem:[%s218 + $0x38] sm:$0xff]
      %vm239 = vcmask 130048
      %v241 = vsel %vm239, %v230, 0
      %243 = vmatprep.subr.mxu0 %v232
      %244 = vmatpush1.msra.mxu0 %v231
      %245 = vmatprep.subr.mxu0 %v236
      %246 = vmatpush1.msra.mxu0 %v235
      %247 = vmatprep.subr.mxu0 0.0
      %248 = vmatpush1.msra.mxu0 0.0
      %249 = vmatprep.subr.mxu0 0.0
      %250 = vmatpush1.msra.mxu0 0.0
      %251 = vmatprep.subr.mxu0 0.0
      %252 = vmatpush1.msra.mxu0 0.0
      %253 = vmatprep.subr.mxu0 0.0
      %254 = vmatpush1.msra.mxu0 0.0
      %255 = vmatprep.subr.mxu0 0.0
      %256 = vmatpush1.msra.mxu0 0.0
      %257 = vmatprep.subr.mxu0 0.0
      %258 = vmatpush1.msra.mxu0 0.0
      %259 = vmatprep.subr.mxu0 0.0
      %260 = vmatpush1.msra.mxu0 0.0
      %261 = vmatprep.subr.mxu0 0.0
      %262 = vmatpush1.msra.mxu0 0.0
      %263 = vmatprep.subr.mxu0 0.0
      %264 = vmatpush1.msra.mxu0 0.0
      %265 = vmatprep.subr.mxu0 0.0
      %266 = vmatpush1.msra.mxu0 0.0
      %267 = vmatprep.subr.mxu0 0.0
      %268 = vmatpush1.msra.mxu0 0.0
      %269 = vmatprep.subr.mxu0 0.0
      %270 = vmatpush1.msra.mxu0 0.0
      %271 = vmatprep.subr.mxu0 0.0
      %272 = vmatpush1.msra.mxu0 0.0
      %273 = vmatprep.subr.mxu0 0.0
      %274 = vmatpush1.msra.mxu0 0.0
      %275 = vmatprep.subr.mxu0 0.0
      %276 = vmatpush1.msra.mxu0 0.0
      %277 = vmatprep.subr.mxu0 0.0
      %278 = vmatpush1.msra.mxu0 0.0
      %279 = vmatprep.subr.mxu0 0.0
      %280 = vmatpush1.msra.mxu0 0.0
      %281 = vmatprep.subr.mxu0 0.0
      %282 = vmatpush1.msra.mxu0 0.0
      %283 = vmatprep.subr.mxu0 0.0
      %284 = vmatpush1.msra.mxu0 0.0
      %285 = vmatprep.subr.mxu0 0.0
      %286 = vmatpush1.msra.mxu0 0.0
      %287 = vmatprep.subr.mxu0 0.0
      %288 = vmatpush1.msra.mxu0 0.0
      %289 = vmatprep.subr.mxu0 0.0
      %290 = vmatpush1.msra.mxu0 0.0
      %291 = vmatprep.subr.mxu0 0.0
      %292 = vmatpush1.msra.mxu0 0.0
      %293 = vmatprep.subr.mxu0 0.0
      %294 = vmatpush1.msra.mxu0 0.0
      %295 = vmatprep.subr.mxu0 0.0
      %296 = vmatpush1.msra.mxu0 0.0
      %297 = vmatprep.subr.mxu0 0.0
      %298 = vmatpush1.msra.mxu0 0.0
      %299 = vmatprep.subr.mxu0 0.0
      %300 = vmatpush1.msra.mxu0 0.0
      %301 = vmatprep.subr.mxu0 0.0
      %302 = vmatpush1.msra.mxu0 0.0
      %303 = vmatprep.subr.mxu0 0.0
      %304 = vmatpush1.msra.mxu0 0.0
      %305 = vmatprep.subr.mxu0 0.0
      %306 = vmatpush1.msra.mxu0 0.0
      %307 = vmatprep.mubr.f32.mxu0 0.0
      %308 = vmatmul.mubr.f32.gmra.mrb[0].mxu0 %v241
      %v309 = vpop.f32.mrb[0].mxu0
      %v310 = vadd.f32 0.0, %v309
      %v311 = vpop.f32.mrb[0].mxu0
      %v312 = vadd.f32 0.0, %v311
      %313 = vdwg.mxu0
      %314 = vmatprep.subr.mxu0 %v234
      %315 = vmatpush1.msra.mxu0 %v233
      %316 = vmatprep.subr.mxu0 %v238
      %317 = vmatpush1.msra.mxu0 %v237
      %318 = vmatprep.subr.mxu0 0.0
      %319 = vmatpush1.msra.mxu0 0.0
      %320 = vmatprep.subr.mxu0 0.0
      %321 = vmatpush1.msra.mxu0 0.0
      %322 = vmatprep.subr.mxu0 0.0
      %323 = vmatpush1.msra.mxu0 0.0
      %324 = vmatprep.subr.mxu0 0.0
      %325 = vmatpush1.msra.mxu0 0.0
      %326 = vmatprep.subr.mxu0 0.0
      %327 = vmatpush1.msra.mxu0 0.0
      %328 = vmatprep.subr.mxu0 0.0
      %329 = vmatpush1.msra.mxu0 0.0
      %330 = vmatprep.subr.mxu0 0.0
      %331 = vmatpush1.msra.mxu0 0.0
      %332 = vmatprep.subr.mxu0 0.0
      %333 = vmatpush1.msra.mxu0 0.0
      %334 = vmatprep.subr.mxu0 0.0
      %335 = vmatpush1.msra.mxu0 0.0
      %336 = vmatprep.subr.mxu0 0.0
      %337 = vmatpush1.msra.mxu0 0.0
      %338 = vmatprep.subr.mxu0 0.0
      %339 = vmatpush1.msra.mxu0 0.0
      %340 = vmatprep.subr.mxu0 0.0
      %341 = vmatpush1.msra.mxu0 0.0
      %342 = vmatprep.subr.mxu0 0.0
      %343 = vmatpush1.msra.mxu0 0.0
      %344 = vmatprep.subr.mxu0 0.0
      %345 = vmatpush1.msra.mxu0 0.0
      %346 = vmatprep.subr.mxu0 0.0
      %347 = vmatpush1.msra.mxu0 0.0
      %348 = vmatprep.subr.mxu0 0.0
      %349 = vmatpush1.msra.mxu0 0.0
      %350 = vmatprep.subr.mxu0 0.0
      %351 = vmatpush1.msra.mxu0 0.0
      %352 = vmatprep.subr.mxu0 0.0
      %353 = vmatpush1.msra.mxu0 0.0
      %354 = vmatprep.subr.mxu0 0.0
      %355 = vmatpush1.msra.mxu0 0.0
      %356 = vmatprep.subr.mxu0 0.0
      %357 = vmatpush1.msra.mxu0 0.0
      %358 = vmatprep.subr.mxu0 0.0
      %359 = vmatpush1.msra.mxu0 0.0
      %360 = vmatprep.subr.mxu0 0.0
      %361 = vmatpush1.msra.mxu0 0.0
      %362 = vmatprep.subr.mxu0 0.0
      %363 = vmatpush1.msra.mxu0 0.0
      %364 = vmatprep.subr.mxu0 0.0
      %365 = vmatpush1.msra.mxu0 0.0
      %366 = vmatprep.subr.mxu0 0.0
      %367 = vmatpush1.msra.mxu0 0.0
      %368 = vmatprep.subr.mxu0 0.0
      %369 = vmatpush1.msra.mxu0 0.0
      %370 = vmatprep.subr.mxu0 0.0
      %371 = vmatpush1.msra.mxu0 0.0
      %372 = vmatprep.subr.mxu0 0.0
      %373 = vmatpush1.msra.mxu0 0.0
      %374 = vmatprep.subr.mxu0 0.0
      %375 = vmatpush1.msra.mxu0 0.0
      %376 = vmatprep.subr.mxu0 0.0
      %377 = vmatpush1.msra.mxu0 0.0
      %378 = vmatprep.mubr.f32.mxu0 0.0
      %379 = vmatmul.mubr.f32.gmra.mrb[0].mxu0 %v241
      %v380 = vpop.f32.mrb[0].mxu0
      %v381 = vadd.f32 0.0, %v380
      %v382 = vpop.f32.mrb[0].mxu0
      %v383 = vadd.f32 0.0, %v382
      %384 = vdwg.mxu0
      %v385 = vmax.f32 %v310, 0.0
      %v386 = vmax.f32 %v312, 0.0
      %v387 = vmax.f32 %v381, 0.0
      %v388 = vmax.f32 %v383, 0.0
      %v389 = vld [vmem:[#allocation2] sm:$0xff]
      %v390 = vadd.f32 %v385, %v386
      %v391 = vadd.f32 %v390, %v387
      %v392 = vadd.f32 %v391, %v388
      %393 = vadd.xlane.f32.xlu0 %v392
      %v394 = vpop.xlane.xlu0 %393
      %v395 = vadd.f32 %v389, %v394
      %vm396 = vcmask 7168
      %397 = vst.msk [vmem:[#allocation2] sm:$0xff] %vm396, %v395
      // Predicated region
      $region41: #{cell_forward.2} parent=35 // pred_check
        %p398 = pneg %p224
      $region42: #{cell_forward.2} parent=35 // pred_check_branch
        %400 = sbr.rel (%p398) target = $region44
      $region43: #{cell_forward.2} parent=35 // pred_region
        %v401 = vld [vmem:[#allocation2] sm:$0xff]
        %v402 = vmul.f32 %v401, 0.00390625
        %v403 = vld [vmem:[%s2] sm:$0x7]
        %v404 = vld [vmem:[%s3] sm:$0x7]
        %vm405 = vcmask 64512
        %v407 = vsel %vm405, %v403, 0
        %409 = vmatprep.subr.mxu0 0.0
        %410 = vmatpush1.msra.mxu0 %v402
        %411 = vmatprep.subr.mxu0 0.0
        %412 = vmatpush1.msra.mxu0 0.0
        %413 = vmatprep.subr.mxu0 0.0
        %414 = vmatpush1.msra.mxu0 0.0
        %415 = vmatprep.subr.mxu0 0.0
        %416 = vmatpush1.msra.mxu0 0.0
        %417 = vmatprep.subr.mxu0 0.0
        %418 = vmatpush1.msra.mxu0 0.0
        %419 = vmatprep.subr.mxu0 0.0
        %420 = vmatpush1.msra.mxu0 0.0
        %421 = vmatprep.subr.mxu0 0.0
        %422 = vmatpush1.msra.mxu0 0.0
        %423 = vmatprep.subr.mxu0 0.0
        %424 = vmatpush1.msra.mxu0 0.0
        %425 = vmatprep.subr.mxu0 0.0
        %426 = vmatpush1.msra.mxu0 0.0
        %427 = vmatprep.subr.mxu0 0.0
        %428 = vmatpush1.msra.mxu0 0.0
        %429 = vmatprep.subr.mxu0 0.0
        %430 = vmatpush1.msra.mxu0 0.0
        %431 = vmatprep.subr.mxu0 0.0
        %432 = vmatpush1.msra.mxu0 0.0
        %433 = vmatprep.subr.mxu0 0.0
        %434 = vmatpush1.msra.mxu0 0.0
        %435 = vmatprep.subr.mxu0 0.0
        %436 = vmatpush1.msra.mxu0 0.0
        %437 = vmatprep.subr.mxu0 0.0
        %438 = vmatpush1.msra.mxu0 0.0
        %439 = vmatprep.subr.mxu0 0.0
        %440 = vmatpush1.msra.mxu0 0.0
        %441 = vmatprep.subr.mxu0 0.0
        %442 = vmatpush1.msra.mxu0 0.0
        %443 = vmatprep.subr.mxu0 0.0
        %444 = vmatpush1.msra.mxu0 0.0
        %445 = vmatprep.subr.mxu0 0.0
        %446 = vmatpush1.msra.mxu0 0.0
        %447 = vmatprep.subr.mxu0 0.0
        %448 = vmatpush1.msra.mxu0 0.0
        %449 = vmatprep.subr.mxu0 0.0
        %450 = vmatpush1.msra.mxu0 0.0
        %451 = vmatprep.subr.mxu0 0.0
        %452 = vmatpush1.msra.mxu0 0.0
        %453 = vmatprep.subr.mxu0 0.0
        %454 = vmatpush1.msra.mxu0 0.0
        %455 = vmatprep.subr.mxu0 0.0
        %456 = vmatpush1.msra.mxu0 0.0
        %457 = vmatprep.subr.mxu0 0.0
        %458 = vmatpush1.msra.mxu0 0.0
        %459 = vmatprep.subr.mxu0 0.0
        %460 = vmatpush1.msra.mxu0 0.0
        %461 = vmatprep.subr.mxu0 0.0
        %462 = vmatpush1.msra.mxu0 0.0
        %463 = vmatprep.subr.mxu0 0.0
        %464 = vmatpush1.msra.mxu0 0.0
        %465 = vmatprep.subr.mxu0 0.0
        %466 = vmatpush1.msra.mxu0 0.0
        %467 = vmatprep.subr.mxu0 0.0
        %468 = vmatpush1.msra.mxu0 0.0
        %469 = vmatprep.subr.mxu0 0.0
        %470 = vmatpush1.msra.mxu0 0.0
        %471 = vmatprep.subr.mxu0 0.0
        %472 = vmatpush1.msra.mxu0 0.0
        %473 = vmatprep.mubr.f32.mxu0 0.0
        %474 = vmatmul.mubr.f32.gmra.mrb[0].mxu0 %v407
        %v475 = vpop.f32.mrb[0].mxu0
        %v476 = vadd.f32 %v404, %v475
        %v477 = vpop.f32.mrb[0].mxu0
        %478 = vdwg.mxu0
        %v479 = vtanh.pop %v476
        %v480 = vmax.f32 %v479, 0.0
        %vm481 = vcmask 2048
        %482 = vst.msk [vmem:[%s223] sm:$0x7] %vm481, %v480
      $region44: #{cell_forward.2} parent=35 // pred_fallthru
        _
      %p483 = scmp.lt.s32.totalorder %s19, 1
      %s484 = scalar_select %p483, %s19, 1
      %s485 = smul.addr %s484, 4
      %s486 = scalar_lea.vmem %s4, %s485
      // Predicated region
      $region45: #{cell_forward.2} parent=35 // pred_check
        %p487 = pneg %p136
      $region46: #{cell_forward.2} parent=35 // pred_check_branch
        %489 = sbr.rel (%p487) target = $region48
      $region47: #{cell_forward.2} parent=35 // pred_region
        _
      $region48: #{cell_forward.2} parent=35 // pred_fallthru
        _
    $region36: #{cell_forward.2} parent=5 // pred_fallthru
      _
    %p490 = scmp.le.s32.totalorder 2, %s10
    // Predicated region
    $region49: #{cell_forward.2} parent=5 // pred_check
      %p491 = pneg %p490
    $region50: #{cell_forward.2} parent=5 // pred_check_branch
      %493 = sbr.rel (%p491) target = $region52
    $region51: #{cell_forward.2} parent=5 // pred_region
      %s494 = ssub.s32 %s10, 2
      // Predicated region
      $region53: #{cell_forward.2} parent=51 // pred_check
        %p495 = pneg %p142
      $region54: #{cell_forward.2} parent=51 // pred_check_branch
        %497 = sbr.rel (%p495) target = $region56
      $region55: #{cell_forward.2} parent=51 // pred_region
        %p498 = scmp.lt.s32.totalorder %s21, 1
        %s499 = scalar_select %p498, %s21, 1
        %s500 = smul.addr %s499, 4
        %s501 = scalar_lea.vmem %s4, %s500
      $region56: #{cell_forward.2} parent=51 // pred_fallthru
        _
    $region52: #{cell_forward.2} parent=5 // pred_fallthru
      _
  $region6: #{cell_forward.2} parent=0 // loop_footer
    %s14 = sadd.s32 1, %s10
  $region7: #{cell_forward.2} parent=0 // loop_footer_branch
    %9 = sbr.rel target = $region3
  $region8: #{cell_forward.2} parent=0 // loop_exit
    _

// kernel: cell_forward.3
$region0: #{cell_forward.3}
  #allocation0 [shape = 'u32[]', space=smem, size = 0x4, offset = 0x4, fixed_abs, tag = 'smem constant byte address 0x4 - core index']
  #allocation1 [shape = 'u32[144,128]{1,0:T(1,128)}', space=vmem, size = 0x12000, scoped, tag = 'internal scratch']
  %s0 = inlined_call_operand.vmem [shape: f32[2,3,1], index: 0, kind: input, shape index: {}]
  %s1 = inlined_call_operand.vmem [shape: f32[2,16,512], index: 1, kind: input, shape index: {}]
  %s2 = inlined_call_operand.vmem [shape: f32[2,16,128], index: 2, kind: input, shape index: {}]
  %s3 = inlined_call_operand.vmem [shape: f32[16,16], index: 3, kind: input, shape index: {}]
  %s4 = inlined_call_operand.vmem [shape: f32[8,16], index: 4, kind: input, shape index: {}]
  %s5 = inlined_call_operand.vmem [shape: f32[32,16], index: 5, kind: input, shape index: {}]
  %s6 = inlined_call_operand.vmem [shape: f32[2,16,512], index: 6, kind: output, shape index: {0}]
  %s7 = inlined_call_operand.vmem [shape: f32[2,8,512], index: 7, kind: output, shape index: {1}]
  %s8 = inlined_call_operand.vmem [shape: f32[2,32,128], index: 8, kind: output, shape index: {2}]
  %9 = xla_tuple %s6, %s7, %s8
  %s10 = sld [smem:[#allocation0]]
  $region77: #{cell_forward.3} parent=0
    _
  %s12 = ssub.s32 1, %s10
  %s13 = scalar_select 0, %s12, %s10
  $region1: #{cell_forward.3} parent=0
    #allocation2 [shape = 'u8[4096]{0}', space=smem, size = 0x1000, scoped, tag = 'input window, operand 0, single buffered']
    #allocation3 [shape = 's32[2]{0}', space=sflag, size = 0x8, scoped, tag = 'scoped memory for cell_forward.3']
    %14 = vsyncpa [#allocation3], 0
    loop: start=0, step=1, limit=4
    $region2: #{cell_forward.3} parent=1 // loop_pre_header
      _
    $region3: #{cell_forward.3} parent=1 // loop_header
      %s16 = sphi 0, %s20
      %p17 = scmp.ge.s32.totalorder %s16, 4
      %s23 = sphi 0, %s35
      %s24 = sphi 0, %s31
      %s25 = sphi 0, %s23
      %s26 = sphi 0, %s24
      %s27 = sphi 0, %s25
      %s28 = sphi 0, %s26
      %s36 = sphi 0, %s36
      %s38 = sphi 0, %s36
      %s39 = sphi 0, %s38
      %s53 = sphi 0, %s39
      %s61 = sphi 0, %s63
      %s64 = sphi 0, %s61
      %s65 = sphi 0, %s64
      %s81 = sphi 0, %s65
      %s89 = sphi 0, %s91
      %s92 = sphi 0, %s89
      %s93 = sphi 0, %s92
      %s109 = sphi 0, %s93
      %s113 = sphi 0, %s113
      %s115 = sphi 0, %s113
      %s116 = sphi 0, %s115
      %s130 = sphi 0, %s116
      %s134 = sphi 0, %s134
      %s136 = sphi 0, %s134
      %s137 = sphi 0, %s136
      %s151 = sphi 0, %s137
      %s155 = sphi 0, %s155
      %s157 = sphi 0, %s155
      %s158 = sphi 0, %s157
      %s172 = sphi 0, %s158
      %s180 = sphi 0, %s182
      %s183 = sphi 0, %s180
      %s184 = sphi 0, %s183
      %s200 = sphi 0, %s184
      %s208 = sphi 0, %s210
      %s211 = sphi 0, %s208
      %s212 = sphi 0, %s211
      %s228 = sphi 0, %s212
      %s236 = sphi 0, %s238
      %s239 = sphi 0, %s236
      %s240 = sphi 0, %s239
      %s256 = sphi 0, %s240
    $region4: #{cell_forward.3} parent=1 // loop_header_branch
      %19 = sbr.rel (%p17) target = $region8
    $region5: #{cell_forward.3} parent=1 // loop_body
      %s21 = ssub.s32 %s16, 1
      %s22 = ssub.s32 %s16, 2
      %s29 = sadd.s32 1, %s24
      %p30 = scmp.ge.s32.totalorder %s29, 1
      %s31 = scalar_select %p30, 0, %s29
      %s32 = sadd.s32 1, %s23
      %s33 = scalar_select %p30, %s32, %s23
      %p34 = scmp.ge.s32.totalorder %s33, 2
      %s35 = scalar_select %p34, 0, %s33
      %s37 = sadd.s32 %s36, 1
      %p40 = scmp.eq.s32.totalorder %s16, 1
      %p41 = scmp.ne.s32.totalorder %s36, %s38
      %p42 = scmp.eq.s32.totalorder %s16, 0
      %p43 = por %p41, %p42
      %p44 = scmp.ne.s32.totalorder %s36, %s38
      %p45 = scmp.eq.s32.totalorder %s21, 1
      %p46 = por %p44, %p45
      %p47 = scmp.ne.s32.totalorder %s38, %s39
      %p48 = scmp.eq.s32.totalorder %s21, 0
      %p49 = por %p47, %p48
      %p50 = scmp.ne.s32.totalorder %s38, %s39
      %p51 = scmp.eq.s32.totalorder %s22, 1
      %p52 = por %p50, %p51
      %p54 = scmp.ne.s32.totalorder %s39, %s53
      %p55 = scmp.eq.s32.totalorder %s22, 0
      %p56 = por %p54, %p55
      %s57 = ssub.s32 %s23, %s35
      %s58 = ssub.s32 %s24, %s31
      %s59 = sor.u32 %s57, %s58
      %p60 = scmp.eq.s32.totalorder %s59, 0
      %s62 = sadd.s32 %s61, 1
      %s63 = scalar_select %p60, %s61, %s62
      %p66 = pneg %p60
      %p67 = scmp.eq.s32.totalorder %s16, 1
      %p68 = por %p66, %p67
      %p69 = scmp.ne.s32.totalorder %s61, %s64
      %p70 = scmp.eq.s32.totalorder %s16, 0
      %p71 = por %p69, %p70
      %p72 = scmp.ne.s32.totalorder %s61, %s64
      %p73 = scmp.eq.s32.totalorder %s21, 1
      %p74 = por %p72, %p73
      %p75 = scmp.ne.s32.totalorder %s64, %s65
      %p76 = scmp.eq.s32.totalorder %s21, 0
      %p77 = por %p75, %p76
      %p78 = scmp.ne.s32.totalorder %s64, %s65
      %p79 = scmp.eq.s32.totalorder %s22, 1
      %p80 = por %p78, %p79
      %p82 = scmp.ne.s32.totalorder %s65, %s81
      %p83 = scmp.eq.s32.totalorder %s22, 0
      %p84 = por %p82, %p83
      %s85 = ssub.s32 %s23, %s35
      %s86 = ssub.s32 %s24, %s31
      %s87 = sor.u32 %s85, %s86
      %p88 = scmp.eq.s32.totalorder %s87, 0
      %s90 = sadd.s32 %s89, 1
      %s91 = scalar_select %p88, %s89, %s90
      %p94 = pneg %p88
      %p95 = scmp.eq.s32.totalorder %s16, 1
      %p96 = por %p94, %p95
      %p97 = scmp.ne.s32.totalorder %s89, %s92
      %p98 = scmp.eq.s32.totalorder %s16, 0
      %p99 = por %p97, %p98
      %p100 = scmp.ne.s32.totalorder %s89, %s92
      %p101 = scmp.eq.s32.totalorder %s21, 1
      %p102 = por %p100, %p101
      %p103 = scmp.ne.s32.totalorder %s92, %s93
      %p104 = scmp.eq.s32.totalorder %s21, 0
      %p105 = por %p103, %p104
      %p106 = scmp.ne.s32.totalorder %s92, %s93
      %p107 = scmp.eq.s32.totalorder %s22, 1
      %p108 = por %p106, %p107
      %p110 = scmp.ne.s32.totalorder %s93, %s109
      %p111 = scmp.eq.s32.totalorder %s22, 0
      %p112 = por %p110, %p111
      %s114 = sadd.s32 %s113, 1
      %p117 = scmp.eq.s32.totalorder %s16, 1
      %p118 = scmp.ne.s32.totalorder %s113, %s115
      %p119 = scmp.eq.s32.totalorder %s16, 0
      %p120 = por %p118, %p119
      %p121 = scmp.ne.s32.totalorder %s113, %s115
      %p122 = scmp.eq.s32.totalorder %s21, 1
      %p123 = por %p121, %p122
      %p124 = scmp.ne.s32.totalorder %s115, %s116
      %p125 = scmp.eq.s32.totalorder %s21, 0
      %p126 = por %p124, %p125
      %p127 = scmp.ne.s32.totalorder %s115, %s116
      %p128 = scmp.eq.s32.totalorder %s22, 1
      %p129 = por %p127, %p128
      %p131 = scmp.ne.s32.totalorder %s116, %s130
      %p132 = scmp.eq.s32.totalorder %s22, 0
      %p133 = por %p131, %p132
      %s135 = sadd.s32 %s134, 1
      %p138 = scmp.eq.s32.totalorder %s16, 1
      %p139 = scmp.ne.s32.totalorder %s134, %s136
      %p140 = scmp.eq.s32.totalorder %s16, 0
      %p141 = por %p139, %p140
      %p142 = scmp.ne.s32.totalorder %s134, %s136
      %p143 = scmp.eq.s32.totalorder %s21, 1
      %p144 = por %p142, %p143
      %p145 = scmp.ne.s32.totalorder %s136, %s137
      %p146 = scmp.eq.s32.totalorder %s21, 0
      %p147 = por %p145, %p146
      %p148 = scmp.ne.s32.totalorder %s136, %s137
      %p149 = scmp.eq.s32.totalorder %s22, 1
      %p150 = por %p148, %p149
      %p152 = scmp.ne.s32.totalorder %s137, %s151
      %p153 = scmp.eq.s32.totalorder %s22, 0
      %p154 = por %p152, %p153
      %s156 = sadd.s32 %s155, 1
      %p159 = scmp.eq.s32.totalorder %s16, 1
      %p160 = scmp.ne.s32.totalorder %s155, %s157
      %p161 = scmp.eq.s32.totalorder %s16, 0
      %p162 = por %p160, %p161
      %p163 = scmp.ne.s32.totalorder %s155, %s157
      %p164 = scmp.eq.s32.totalorder %s21, 1
      %p165 = por %p163, %p164
      %p166 = scmp.ne.s32.totalorder %s157, %s158
      %p167 = scmp.eq.s32.totalorder %s21, 0
      %p168 = por %p166, %p167
      %p169 = scmp.ne.s32.totalorder %s157, %s158
      %p170 = scmp.eq.s32.totalorder %s22, 1
      %p171 = por %p169, %p170
      %p173 = scmp.ne.s32.totalorder %s158, %s172
      %p174 = scmp.eq.s32.totalorder %s22, 0
      %p175 = por %p173, %p174
      %s176 = ssub.s32 %s23, %s35
      %s177 = ssub.s32 %s24, %s31
      %s178 = sor.u32 %s176, %s177
      %p179 = scmp.eq.s32.totalorder %s178, 0
      %s181 = sadd.s32 %s180, 1
      %s182 = scalar_select %p179, %s180, %s181
      %p185 = pneg %p179
      %p186 = scmp.eq.s32.totalorder %s16, 1
      %p187 = por %p185, %p186
      %p188 = scmp.ne.s32.totalorder %s180, %s183
      %p189 = scmp.eq.s32.totalorder %s16, 0
      %p190 = por %p188, %p189
      %p191 = scmp.ne.s32.totalorder %s180, %s183
      %p192 = scmp.eq.s32.totalorder %s21, 1
      %p193 = por %p191, %p192
      %p194 = scmp.ne.s32.totalorder %s183, %s184
      %p195 = scmp.eq.s32.totalorder %s21, 0
      %p196 = por %p194, %p195
      %p197 = scmp.ne.s32.totalorder %s183, %s184
      %p198 = scmp.eq.s32.totalorder %s22, 1
      %p199 = por %p197, %p198
      %p201 = scmp.ne.s32.totalorder %s184, %s200
      %p202 = scmp.eq.s32.totalorder %s22, 0
      %p203 = por %p201, %p202
      %s204 = ssub.s32 %s23, %s35
      %s205 = ssub.s32 %s24, %s31
      %s206 = sor.u32 %s204, %s205
      %p207 = scmp.eq.s32.totalorder %s206, 0
      %s209 = sadd.s32 %s208, 1
      %s210 = scalar_select %p207, %s208, %s209
      %p213 = pneg %p207
      %p214 = scmp.eq.s32.totalorder %s16, 1
      %p215 = por %p213, %p214
      %p216 = scmp.ne.s32.totalorder %s208, %s211
      %p217 = scmp.eq.s32.totalorder %s16, 0
      %p218 = por %p216, %p217
      %p219 = scmp.ne.s32.totalorder %s208, %s211
      %p220 = scmp.eq.s32.totalorder %s21, 1
      %p221 = por %p219, %p220
      %p222 = scmp.ne.s32.totalorder %s211, %s212
      %p223 = scmp.eq.s32.totalorder %s21, 0
      %p224 = por %p222, %p223
      %p225 = scmp.ne.s32.totalorder %s211, %s212
      %p226 = scmp.eq.s32.totalorder %s22, 1
      %p227 = por %p225, %p226
      %p229 = scmp.ne.s32.totalorder %s212, %s228
      %p230 = scmp.eq.s32.totalorder %s22, 0
      %p231 = por %p229, %p230
      %s232 = ssub.s32 %s23, %s35
      %s233 = ssub.s32 %s24, %s31
      %s234 = sor.u32 %s232, %s233
      %p235 = scmp.eq.s32.totalorder %s234, 0
      %s237 = sadd.s32 %s236, 1
      %s238 = scalar_select %p235, %s236, %s237
      %p241 = pneg %p235
      %p242 = scmp.eq.s32.totalorder %s16, 1
      %p243 = por %p241, %p242
      %p244 = scmp.ne.s32.totalorder %s236, %s239
      %p245 = scmp.eq.s32.totalorder %s16, 0
      %p246 = por %p244, %p245
      %p247 = scmp.ne.s32.totalorder %s236, %s239
      %p248 = scmp.eq.s32.totalorder %s21, 1
      %p249 = por %p247, %p248
      %p250 = scmp.ne.s32.totalorder %s239, %s240
      %p251 = scmp.eq.s32.totalorder %s21, 0
      %p252 = por %p250, %p251
      %p253 = scmp.ne.s32.totalorder %s239, %s240
      %p254 = scmp.eq.s32.totalorder %s22, 1
      %p255 = por %p253, %p254
      %p257 = scmp.ne.s32.totalorder %s240, %s256
      %p258 = scmp.eq.s32.totalorder %s22, 0
      %p259 = por %p257, %p258
      %p260 = scmp.le.s32.totalorder 1, %s16
      %p261 = scmp.lt.s32.totalorder %s16, 3
      %p262 = pnand %p260, %p261
      %p263 = pneg %p262
      // Predicated region
      $region9: #{cell_forward.3} parent=5 // pred_check
        _
      $region10: #{cell_forward.3} parent=5 // pred_check_branch
        %265 = sbr.rel (%p262) target = $region12
      $region11: #{cell_forward.3} parent=5 // pred_region
        %s266 = ssub.s32 %s16, 1
        // Predicated region
        $region13: #{cell_forward.3} parent=11 // pred_check
          %p267 = pneg %p49
        $region14: #{cell_forward.3} parent=11 // pred_check_branch
          %269 = sbr.rel (%p267) target = $region16
        $region15: #{cell_forward.3} parent=11 // pred_region
          %s271 = ssub.s32 128, 128
          %272 = vsyncadd [#allocation3], %s271
          %s273 = sshll.u32 %s0, 4
          %s274 = int_to_ptr.vmem [resolvable:$true] %s273
          %279 = dma.vmem_to_smem %s274, 128, [#allocation2], [#allocation3], 64, 64, 4
        $region16: #{cell_forward.3} parent=11 // pred_fallthru
          _
        // Predicated region
        $region17: #{cell_forward.3} parent=11 // pred_check
          %p280 = pneg %p126
        $region18: #{cell_forward.3} parent=11 // pred_check_branch
          %282 = sbr.rel (%p280) target = $region20
        $region19: #{cell_forward.3} parent=11 // pred_region
          _
        $region20: #{cell_forward.3} parent=11 // pred_fallthru
          _
        // Predicated region
        $region21: #{cell_forward.3} parent=11 // pred_check
          %p283 = pneg %p147
        $region22: #{cell_forward.3} parent=11 // pred_check_branch
          %285 = sbr.rel (%p283) target = $region24
        $region23: #{cell_forward.3} parent=11 // pred_region
          _
        $region24: #{cell_forward.3} parent=11 // pred_fallthru
          _
        // Predicated region
        $region25: #{cell_forward.3} parent=11 // pred_check
          %p286 = pneg %p168
        $region26: #{cell_forward.3} parent=11 // pred_check_branch
          %288 = sbr.rel (%p286) target = $region28
        $region27: #{cell_forward.3} parent=11 // pred_region
          _
        $region28: #{cell_forward.3} parent=11 // pred_fallthru
          _
      $region12: #{cell_forward.3} parent=5 // pred_fallthru
        _
      %p289 = scmp.lt.s32.totalorder %s16, 2
      // Predicated region
      $region29: #{cell_forward.3} parent=5 // pred_check
        %p290 = pneg %p289
      $region30: #{cell_forward.3} parent=5 // pred_check_branch
        %292 = sbr.rel (%p290) target = $region32
      $region31: #{cell_forward.3} parent=5 // pred_region
        // Predicated region
        $region33: #{cell_forward.3} parent=31 // pred_check
          %p293 = pneg %p71
        $region34: #{cell_forward.3} parent=31 // pred_check_branch
          %295 = sbr.rel (%p293) target = $region36
        $region35: #{cell_forward.3} parent=31 // pred_region
          %s296 = smul.u32 4, %s24
          %p297 = scmp.lt.s32.totalorder %s23, 1
          %s298 = scalar_select %p297, %s23, 1
          %p299 = scmp.lt.s32.totalorder %s296, 3
          %s300 = scalar_select %p299, %s296, 3
          %s301 = smul.addr %s298, 8
          %s302 = sadd.s32 %s300, %s301
          %s303 = smul.addr %s302, 8
          %s304 = scalar_lea.vmem %s1, %s303
          %s305 = smul.u32 4, %s24
        $region36: #{cell_forward.3} parent=31 // pred_fallthru
          _
        // Predicated region
        $region37: #{cell_forward.3} parent=31 // pred_check
          %p306 = pneg %p99
        $region38: #{cell_forward.3} parent=31 // pred_check_branch
          %308 = sbr.rel (%p306) target = $region40
        $region39: #{cell_forward.3} parent=31 // pred_region
          %p309 = scmp.lt.s32.totalorder %s23, 1
          %s310 = scalar_select %p309, %s23, 1
          %p311 = scmp.lt.s32.totalorder %s24, 0
          %s312 = scalar_select %p311, %s24, 0
          %s313 = smul.addr %s310, 2
          %s314 = sadd.s32 %s312, %s313
          %s315 = smul.addr %s314, 8
          %s316 = scalar_lea.vmem %s2, %s315
        $region40: #{cell_forward.3} parent=31 // pred_fallthru
          _
      $region32: #{cell_forward.3} parent=5 // pred_fallthru
        _
      %p317 = scmp.le.s32.totalorder 1, %s16
      %p318 = scmp.lt.s32.totalorder %s16, 3
      %p319 = pnand %p317, %p318
      %p320 = pneg %p319
      // Predicated region
      $region41: #{cell_forward.3} parent=5 // pred_check
        _
      $region42: #{cell_forward.3} parent=5 // pred_check_branch
        %322 = sbr.rel (%p319) target = $region44
      $region43: #{cell_forward.3} parent=5 // pred_region
        %s323 = ssub.s32 %s16, 1
        // Predicated region
        $region45: #{cell_forward.3} parent=43 // pred_check
          %p324 = pneg %p49
        $region46: #{cell_forward.3} parent=43 // pred_check_branch
          %326 = sbr.rel (%p324) target = $region48
        $region47: #{cell_forward.3} parent=43 // pred_region
          %327 = dma.done [#allocation3], 128
        $region48: #{cell_forward.3} parent=43 // pred_fallthru
          _
        %328 = sfence
        %p329 = pneg %p49
        %p330 = pneg %p46
        %s331 = smul.u32 4, %s26
        %p332 = scmp.lt.s32.totalorder %s25, 1
        %s333 = scalar_select %p332, %s25, 1
        %p334 = scmp.lt.s32.totalorder %s331, 3
        %s335 = scalar_select %p334, %s331, 3
        %s336 = smul.addr %s333, 8
        %s337 = sadd.s32 %s335, %s336
        %s338 = smul.addr %s337, 8
        %s339 = scalar_lea.vmem %s1, %s338
        %p340 = pneg %p77
        %p341 = pneg %p74
        %p342 = scmp.lt.s32.totalorder %s25, 1
        %s343 = scalar_select %p342, %s25, 1
        %p344 = scmp.lt.s32.totalorder %s26, 0
        %s345 = scalar_select %p344, %s26, 0
        %s346 = smul.addr %s343, 2
        %s347 = sadd.s32 %s345, %s346
        %s348 = smul.addr %s347, 8
        %s349 = scalar_lea.vmem %s2, %s348
        %p350 = pneg %p105
        %p351 = pneg %p102
        %p352 = pneg %p126
        %p353 = pneg %p123
        %p354 = pneg %p147
        %p355 = pneg %p144
        %p356 = pneg %p168
        %p357 = pneg %p165
        %p358 = pneg %p196
        %p359 = pneg %p193
        %s360 = smul.u32 4, %s26
        %p361 = scmp.lt.s32.totalorder %s25, 1
        %s362 = scalar_select %p361, %s25, 1
        %p363 = scmp.lt.s32.totalorder %s360, 3
        %s364 = scalar_select %p363, %s360, 3
        %s365 = smul.addr %s362, 8
        %s366 = sadd.s32 %s364, %s365
        %s367 = smul.addr %s366, 8
        %s368 = scalar_lea.vmem %s6, %s367
        %p369 = pneg %p224
        %p370 = pneg %p221
        %s371 = smul.u32 4, %s26
        %p372 = scmp.lt.s32.totalorder %s25, 1
        %s373 = scalar_select %p372, %s25, 1
        %p374 = scmp.lt.s32.totalorder %s371, 3
        %s375 = scalar_select %p374, %s371, 3
        %s376 = smul.addr %s373, 4
        %s377 = sadd.s32 %s375, %s376
        %s378 = smul.addr %s377, 8
        %s379 = scalar_lea.vmem %s7, %s378
        %p380 = pneg %p252
        %p381 = pneg %p249
        %p382 = scmp.lt.s32.totalorder %s25, 1
        %s383 = scalar_select %p382, %s25, 1
        %p384 = scmp.lt.s32.totalorder %s26, 0
        %s385 = scalar_select %p384, %s26, 0
        %s386 = smul.addr %s383, 4
        %s387 = sadd.s32 %s385, %s386
        %s388 = smul.addr %s387, 8
        %s389 = scalar_lea.vmem %s8, %s388
        %s390 = smul.u32 4, %s26
        %p391 = scmp.lt.s32.totalorder %s25, 1
        %s392 = scalar_select %p391, %s25, 1
        %p393 = scmp.lt.s32.totalorder %s390, 3
        %s394 = scalar_select %p393, %s390, 3
        %s395 = smul.addr %s392, 8
        %s396 = sadd.s32 %s394, %s395
        %s397 = smul.addr %s396, 8
        %s398 = scalar_lea.vmem %s1, %s397
        %s399 = smul.u32 4, %s26
        %p400 = scmp.lt.s32.totalorder %s25, 1
        %s401 = scalar_select %p400, %s25, 1
        %p402 = scmp.lt.s32.totalorder %s26, 0
        %s403 = scalar_select %p402, %s26, 0
        %s404 = smul.addr %s401, 2
        %s405 = sadd.s32 %s403, %s404
        %s406 = smul.addr %s405, 8
        %s407 = scalar_lea.vmem %s2, %s406
        %s408 = smul.u32 4, %s26
        %p409 = scmp.lt.s32.totalorder %s25, 1
        %s410 = scalar_select %p409, %s25, 1
        %p411 = scmp.lt.s32.totalorder %s408, 3
        %s412 = scalar_select %p411, %s408, 3
        %s413 = smul.addr %s410, 8
        %s414 = sadd.s32 %s412, %s413
        %s415 = smul.addr %s414, 8
        %s416 = scalar_lea.vmem %s6, %s415
        %s417 = smul.u32 4, %s26
        %s418 = smul.u32 4, %s26
        %p419 = scmp.lt.s32.totalorder %s25, 1
        %s420 = scalar_select %p419, %s25, 1
        %p421 = scmp.lt.s32.totalorder %s418, 3
        %s422 = scalar_select %p421, %s418, 3
        %s423 = smul.addr %s420, 4
        %s424 = sadd.s32 %s422, %s423
        %s425 = smul.addr %s424, 8
        %s426 = scalar_lea.vmem %s7, %s425
        %s427 = smul.u32 4, %s26
        %p428 = scmp.lt.s32.totalorder %s25, 1
        %s429 = scalar_select %p428, %s25, 1
        %p430 = scmp.lt.s32.totalorder %s26, 0
        %s431 = scalar_select %p430, %s26, 0
        %s432 = smul.addr %s429, 4
        %s433 = sadd.s32 %s431, %s432
        %s434 = smul.addr %s433, 8
        %s435 = scalar_lea.vmem %s8, %s434
        %s436 = smul.u32 %s25, 4
        %s437 = smul.u32 %s436, 128
        %s438 = sld [smem:[#allocation2 + %s437]]
        %s439 = sadd.s32 1, %s436
        %s440 = smul.u32 %s439, 128
        %s441 = sld [smem:[#allocation2 + %s440]]
        %s442 = sadd.s32 2, %s436
        %s443 = smul.u32 %s442, 128
        %s444 = sld [smem:[#allocation2 + %s443]]
        %s445 = sadd.f32 %s438, %s441
        %s446 = sadd.f32 %s445, %s444
        %p447 = scmp.lt.f32.partialorder %s446, 0.0001
        %s448 = scalar_select %p447, 1, 0
        %s449 = scvt.s32.f32 %s448
        %v450 = vld [vmem:[%s398] sm:$0xff]
        %v451 = vld [vmem:[%s398 + $0x8] sm:$0xff]
        %v452 = vld [vmem:[%s398 + $0x10] sm:$0xff]
        %v453 = vld [vmem:[%s398 + $0x18] sm:$0xff]
        %v454 = vld [vmem:[%s398 + $0x20] sm:$0xff]
        %v455 = vld [vmem:[%s398 + $0x28] sm:$0xff]
        %v456 = vld [vmem:[%s398 + $0x30] sm:$0xff]
        %v457 = vld [vmem:[%s398 + $0x38] sm:$0xff]
        %v458 = vld [vmem:[%s3] sm:$0xff]
        %v459 = vld [vmem:[%s3 + $0x8] sm:$0xff]
        %vm460 = vcmask 130048
        %v462 = vsel %vm460, %v458, 0
        %v465 = vsel %vm460, %v459, 0
        %467 = vmatprep.subr.mxu0 %v451
        %468 = vmatpush1.msra.mxu0 %v450
        %469 = vmatprep.subr.mxu0 %v455
        %470 = vmatpush1.msra.mxu0 %v454
        %471 = vmatprep.subr.mxu0 0.0
        %472 = vmatpush1.msra.mxu0 0.0
        %473 = vmatprep.subr.mxu0 0.0
        %474 = vmatpush1.msra.mxu0 0.0
        %475 = vmatprep.subr.mxu0 0.0
        %476 = vmatpush1.msra.mxu0 0.0
        %477 = vmatprep.subr.mxu0 0.0
        %478 = vmatpush1.msra.mxu0 0.0
        %479 = vmatprep.subr.mxu0 0.0
        %480 = vmatpush1.msra.mxu0 0.0
        %481 = vmatprep.subr.mxu0 0.0
        %482 = vmatpush1.msra.mxu0 0.0
        %483 = vmatprep.subr.mxu0 0.0
        %484 = vmatpush1.msra.mxu0 0.0
        %485 = vmatprep.subr.mxu0 0.0
        %486 = vmatpush1.msra.mxu0 0.0
        %487 = vmatprep.subr.mxu0 0.0
        %488 = vmatpush1.msra.mxu0 0.0
        %489 = vmatprep.subr.mxu0 0.0
        %490 = vmatpush1.msra.mxu0 0.0
        %491 = vmatprep.subr.mxu0 0.0
        %492 = vmatpush1.msra.mxu0 0.0
        %493 = vmatprep.subr.mxu0 0.0
        %494 = vmatpush1.msra.mxu0 0.0
        %495 = vmatprep.subr.mxu0 0.0
        %496 = vmatpush1.msra.mxu0 0.0
        %497 = vmatprep.subr.mxu0 0.0
        %498 = vmatpush1.msra.mxu0 0.0
        %499 = vmatprep.subr.mxu0 0.0
        %500 = vmatpush1.msra.mxu0 0.0
        %501 = vmatprep.subr.mxu0 0.0
        %502 = vmatpush1.msra.mxu0 0.0
        %503 = vmatprep.subr.mxu0 0.0
        %504 = vmatpush1.msra.mxu0 0.0
        %505 = vmatprep.subr.mxu0 0.0
        %506 = vmatpush1.msra.mxu0 0.0
        %507 = vmatprep.subr.mxu0 0.0
        %508 = vmatpush1.msra.mxu0 0.0
        %509 = vmatprep.subr.mxu0 0.0
        %510 = vmatpush1.msra.mxu0 0.0
        %511 = vmatprep.subr.mxu0 0.0
        %512 = vmatpush1.msra.mxu0 0.0
        %513 = vmatprep.subr.mxu0 0.0
        %514 = vmatpush1.msra.mxu0 0.0
        %515 = vmatprep.subr.mxu0 0.0
        %516 = vmatpush1.msra.mxu0 0.0
        %517 = vmatprep.subr.mxu0 0.0
        %518 = vmatpush1.msra.mxu0 0.0
        %519 = vmatprep.subr.mxu0 0.0
        %520 = vmatpush1.msra.mxu0 0.0
        %521 = vmatprep.subr.mxu0 0.0
        %522 = vmatpush1.msra.mxu0 0.0
        %523 = vmatprep.subr.mxu0 0.0
        %524 = vmatpush1.msra.mxu0 0.0
        %525 = vmatprep.subr.mxu0 0.0
        %526 = vmatpush1.msra.mxu0 0.0
        %527 = vmatprep.subr.mxu0 0.0
        %528 = vmatpush1.msra.mxu0 0.0
        %529 = vmatprep.subr.mxu0 0.0
        %530 = vmatpush1.msra.mxu0 0.0
        %531 = vmatprep.mubr.f32.mxu0 0.0
        %532 = vmatmul.mubr.f32.gmra.mrb[0].mxu0 %v462
        %v533 = vpop.f32.mrb[0].mxu0
        %v534 = vadd.f32 0.0, %v533
        %v535 = vpop.f32.mrb[0].mxu0
        %v536 = vadd.f32 0.0, %v535
        %537 = vmatprep.mubr.f32.mxu0 0.0
        %538 = vmatmul.mubr.f32.gmra.mrb[0].mxu0 %v465
        %v539 = vpop.f32.mrb[0].mxu0
        %v540 = vadd.f32 0.0, %v539
        %v541 = vpop.f32.mrb[0].mxu0
        %v542 = vadd.f32 0.0, %v541
        %543 = vdwg.mxu0
        %544 = vmatprep.subr.mxu0 %v453
        %545 = vmatpush1.msra.mxu0 %v452
        %546 = vmatprep.subr.mxu0 %v457
        %547 = vmatpush1.msra.mxu0 %v456
        %548 = vmatprep.subr.mxu0 0.0
        %549 = vmatpush1.msra.mxu0 0.0
        %550 = vmatprep.subr.mxu0 0.0
        %551 = vmatpush1.msra.mxu0 0.0
        %552 = vmatprep.subr.mxu0 0.0
        %553 = vmatpush1.msra.mxu0 0.0
        %554 = vmatprep.subr.mxu0 0.0
        %555 = vmatpush1.msra.mxu0 0.0
        %556 = vmatprep.subr.mxu0 0.0
        %557 = vmatpush1.msra.mxu0 0.0
        %558 = vmatprep.subr.mxu0 0.0
        %559 = vmatpush1.msra.mxu0 0.0
        %560 = vmatprep.subr.mxu0 0.0
        %561 = vmatpush1.msra.mxu0 0.0
        %562 = vmatprep.subr.mxu0 0.0
        %563 = vmatpush1.msra.mxu0 0.0
        %564 = vmatprep.subr.mxu0 0.0
        %565 = vmatpush1.msra.mxu0 0.0
        %566 = vmatprep.subr.mxu0 0.0
        %567 = vmatpush1.msra.mxu0 0.0
        %568 = vmatprep.subr.mxu0 0.0
        %569 = vmatpush1.msra.mxu0 0.0
        %570 = vmatprep.subr.mxu0 0.0
        %571 = vmatpush1.msra.mxu0 0.0
        %572 = vmatprep.subr.mxu0 0.0
        %573 = vmatpush1.msra.mxu0 0.0
        %574 = vmatprep.subr.mxu0 0.0
        %575 = vmatpush1.msra.mxu0 0.0
        %576 = vmatprep.subr.mxu0 0.0
        %577 = vmatpush1.msra.mxu0 0.0
        %578 = vmatprep.subr.mxu0 0.0
        %579 = vmatpush1.msra.mxu0 0.0
        %580 = vmatprep.subr.mxu0 0.0
        %581 = vmatpush1.msra.mxu0 0.0
        %582 = vmatprep.subr.mxu0 0.0
        %583 = vmatpush1.msra.mxu0 0.0
        %584 = vmatprep.subr.mxu0 0.0
        %585 = vmatpush1.msra.mxu0 0.0
        %586 = vmatprep.subr.mxu0 0.0
        %587 = vmatpush1.msra.mxu0 0.0
        %588 = vmatprep.subr.mxu0 0.0
        %589 = vmatpush1.msra.mxu0 0.0
        %590 = vmatprep.subr.mxu0 0.0
        %591 = vmatpush1.msra.mxu0 0.0
        %592 = vmatprep.subr.mxu0 0.0
        %593 = vmatpush1.msra.mxu0 0.0
        %594 = vmatprep.subr.mxu0 0.0
        %595 = vmatpush1.msra.mxu0 0.0
        %596 = vmatprep.subr.mxu0 0.0
        %597 = vmatpush1.msra.mxu0 0.0
        %598 = vmatprep.subr.mxu0 0.0
        %599 = vmatpush1.msra.mxu0 0.0
        %600 = vmatprep.subr.mxu0 0.0
        %601 = vmatpush1.msra.mxu0 0.0
        %602 = vmatprep.subr.mxu0 0.0
        %603 = vmatpush1.msra.mxu0 0.0
        %604 = vmatprep.subr.mxu0 0.0
        %605 = vmatpush1.msra.mxu0 0.0
        %606 = vmatprep.subr.mxu0 0.0
        %607 = vmatpush1.msra.mxu0 0.0
        %608 = vmatprep.mubr.f32.mxu0 0.0
        %609 = vmatmul.mubr.f32.gmra.mrb[0].mxu0 %v462
        %v610 = vpop.f32.mrb[0].mxu0
        %v611 = vadd.f32 0.0, %v610
        %v612 = vpop.f32.mrb[0].mxu0
        %v613 = vadd.f32 0.0, %v612
        %614 = vmatprep.mubr.f32.mxu0 0.0
        %615 = vmatmul.mubr.f32.gmra.mrb[0].mxu0 %v465
        %v616 = vpop.f32.mrb[0].mxu0
        %v617 = vadd.f32 0.0, %v616
        %v618 = vpop.f32.mrb[0].mxu0
        %v619 = vadd.f32 0.0, %v618
        %620 = vdwg.mxu0
        %v621 = vmax.f32 %v534, 0.0
        %v622 = vmax.f32 %v536, 0.0
        %v623 = vmax.f32 %v611, 0.0
        %v624 = vmax.f32 %v613, 0.0
        %v625 = vmax.f32 %v540, 0.0
        %v626 = vmax.f32 %v542, 0.0
        %v627 = vmax.f32 %v617, 0.0
        %v628 = vmax.f32 %v619, 0.0
        %v629 = vadd.f32 %v621, %v450
        %v630 = vadd.f32 %v622, %v451
        %v631 = vadd.f32 %v623, %v452
        %v632 = vadd.f32 %v624, %v453
        %v633 = vadd.f32 %v625, %v454
        %v634 = vadd.f32 %v626, %v455
        %v635 = vadd.f32 %v627, %v456
        %v636 = vadd.f32 %v628, %v457
        %v637 = vmax.f32 %v629, 0.0
        %v638 = vmax.f32 %v630, 0.0
        %v639 = vmax.f32 %v631, 0.0
        %v640 = vmax.f32 %v632, 0.0
        %v641 = vmax.f32 %v633, 0.0
        %v642 = vmax.f32 %v634, 0.0
        %v643 = vmax.f32 %v635, 0.0
        %v644 = vmax.f32 %v636, 0.0
        %v645 = vstv %s449
        %v646 = vmul.f32 %v645, %v450
        %v647 = vmul.f32 %v645, %v451
        %v648 = vmul.f32 %v645, %v452
        %v649 = vmul.f32 %v645, %v453
        %v650 = vmul.f32 %v645, %v454
        %v651 = vmul.f32 %v645, %v455
        %v652 = vmul.f32 %v645, %v456
        %v653 = vmul.f32 %v645, %v457
        %v654 = vstv %s438
        %v655 = vmul.f32 %v654, %v637
        %v656 = vmul.f32 %v654, %v638
        %v657 = vmul.f32 %v654, %v639
        %v658 = vmul.f32 %v654, %v640
        %v659 = vmul.f32 %v654, %v641
        %v660 = vmul.f32 %v654, %v642
        %v661 = vmul.f32 %v654, %v643
        %v662 = vmul.f32 %v654, %v644
        %v663 = vadd.f32 %v646, %v655
        %v664 = vadd.f32 %v647, %v656
        %v665 = vadd.f32 %v648, %v657
        %v666 = vadd.f32 %v649, %v658
        %v667 = vadd.f32 %v650, %v659
        %v668 = vadd.f32 %v651, %v660
        %v669 = vadd.f32 %v652, %v661
        %v670 = vadd.f32 %v653, %v662
        %671 = vst [vmem:[%s416] sm:$0xff] %v663
        %672 = vst [vmem:[%s416 + $0x8] sm:$0xff] %v664
        %673 = vst [vmem:[%s416 + $0x10] sm:$0xff] %v665
        %674 = vst [vmem:[%s416 + $0x18] sm:$0xff] %v666
        %675 = vst [vmem:[%s416 + $0x20] sm:$0xff] %v667
        %676 = vst [vmem:[%s416 + $0x28] sm:$0xff] %v668
        %677 = vst [vmem:[%s416 + $0x30] sm:$0xff] %v669
        %678 = vst [vmem:[%s416 + $0x38] sm:$0xff] %v670
        %v679 = vld [vmem:[%s4] sm:$0xff]
        %v681 = vsel %vm460, %v679, 0
        %683 = vmatprep.subr.mxu0 %v638
        %684 = vmatpush1.msra.mxu0 %v637
        %685 = vmatprep.subr.mxu0 %v642
        %686 = vmatpush1.msra.mxu0 %v641
        %687 = vmatprep.subr.mxu0 0.0
        %688 = vmatpush1.msra.mxu0 0.0
        %689 = vmatprep.subr.mxu0 0.0
        %690 = vmatpush1.msra.mxu0 0.0
        %691 = vmatprep.subr.mxu0 0.0
        %692 = vmatpush1.msra.mxu0 0.0
        %693 = vmatprep.subr.mxu0 0.0
        %694 = vmatpush1.msra.mxu0 0.0
        %695 = vmatprep.subr.mxu0 0.0
        %696 = vmatpush1.msra.mxu0 0.0
        %697 = vmatprep.subr.mxu0 0.0
        %698 = vmatpush1.msra.mxu0 0.0
        %699 = vmatprep.subr.mxu0 0.0
        %700 = vmatpush1.msra.mxu0 0.0
        %701 = vmatprep.subr.mxu0 0.0
        %702 = vmatpush1.msra.mxu0 0.0
        %703 = vmatprep.subr.mxu0 0.0
        %704 = vmatpush1.msra.mxu0 0.0
        %705 = vmatprep.subr.mxu0 0.0
        %706 = vmatpush1.msra.mxu0 0.0
        %707 = vmatprep.subr.mxu0 0.0
        %708 = vmatpush1.msra.mxu0 0.0
        %709 = vmatprep.subr.mxu0 0.0
        %710 = vmatpush1.msra.mxu0 0.0
        %711 = vmatprep.subr.mxu0 0.0
        %712 = vmatpush1.msra.mxu0 0.0
        %713 = vmatprep.subr.mxu0 0.0
        %714 = vmatpush1.msra.mxu0 0.0
        %715 = vmatprep.subr.mxu0 0.0
        %716 = vmatpush1.msra.mxu0 0.0
        %717 = vmatprep.subr.mxu0 0.0
        %718 = vmatpush1.msra.mxu0 0.0
        %719 = vmatprep.subr.mxu0 0.0
        %720 = vmatpush1.msra.mxu0 0.0
        %721 = vmatprep.subr.mxu0 0.0
        %722 = vmatpush1.msra.mxu0 0.0
        %723 = vmatprep.subr.mxu0 0.0
        %724 = vmatpush1.msra.mxu0 0.0
        %725 = vmatprep.subr.mxu0 0.0
        %726 = vmatpush1.msra.mxu0 0.0
        %727 = vmatprep.subr.mxu0 0.0
        %728 = vmatpush1.msra.mxu0 0.0
        %729 = vmatprep.subr.mxu0 0.0
        %730 = vmatpush1.msra.mxu0 0.0
        %731 = vmatprep.subr.mxu0 0.0
        %732 = vmatpush1.msra.mxu0 0.0
        %733 = vmatprep.subr.mxu0 0.0
        %734 = vmatpush1.msra.mxu0 0.0
        %735 = vmatprep.subr.mxu0 0.0
        %736 = vmatpush1.msra.mxu0 0.0
        %737 = vmatprep.subr.mxu0 0.0
        %738 = vmatpush1.msra.mxu0 0.0
        %739 = vmatprep.subr.mxu0 0.0
        %740 = vmatpush1.msra.mxu0 0.0
        %741 = vmatprep.subr.mxu0 0.0
        %742 = vmatpush1.msra.mxu0 0.0
        %743 = vmatprep.subr.mxu0 0.0
        %744 = vmatpush1.msra.mxu0 0.0
        %745 = vmatprep.subr.mxu0 0.0
        %746 = vmatpush1.msra.mxu0 0.0
        %747 = vmatprep.mubr.f32.mxu0 0.0
        %748 = vmatmul.mubr.f32.gmra.mrb[0].mxu0 %v681
        %v749 = vpop.f32.mrb[0].mxu0
        %v750 = vadd.f32 0.0, %v749
        %v751 = vpop.f32.mrb[0].mxu0
        %v752 = vadd.f32 0.0, %v751
        %753 = vdwg.mxu0
        %754 = vmatprep.subr.mxu0 %v640
        %755 = vmatpush1.msra.mxu0 %v639
        %756 = vmatprep.subr.mxu0 %v644
        %757 = vmatpush1.msra.mxu0 %v643
        %758 = vmatprep.subr.mxu0 0.0
        %759 = vmatpush1.msra.mxu0 0.0
        %760 = vmatprep.subr.mxu0 0.0
        %761 = vmatpush1.msra.mxu0 0.0
        %762 = vmatprep.subr.mxu0 0.0
        %763 = vmatpush1.msra.mxu0 0.0
        %764 = vmatprep.subr.mxu0 0.0
        %765 = vmatpush1.msra.mxu0 0.0
        %766 = vmatprep.subr.mxu0 0.0
        %767 = vmatpush1.msra.mxu0 0.0
        %768 = vmatprep.subr.mxu0 0.0
        %769 = vmatpush1.msra.mxu0 0.0
        %770 = vmatprep.subr.mxu0 0.0
        %771 = vmatpush1.msra.mxu0 0.0
        %772 = vmatprep.subr.mxu0 0.0
        %773 = vmatpush1.msra.mxu0 0.0
        %774 = vmatprep.subr.mxu0 0.0
        %775 = vmatpush1.msra.mxu0 0.0
        %776 = vmatprep.subr.mxu0 0.0
        %777 = vmatpush1.msra.mxu0 0.0
        %778 = vmatprep.subr.mxu0 0.0
        %779 = vmatpush1.msra.mxu0 0.0
        %780 = vmatprep.subr.mxu0 0.0
        %781 = vmatpush1.msra.mxu0 0.0
        %782 = vmatprep.subr.mxu0 0.0
        %783 = vmatpush1.msra.mxu0 0.0
        %784 = vmatprep.subr.mxu0 0.0
        %785 = vmatpush1.msra.mxu0 0.0
        %786 = vmatprep.subr.mxu0 0.0
        %787 = vmatpush1.msra.mxu0 0.0
        %788 = vmatprep.subr.mxu0 0.0
        %789 = vmatpush1.msra.mxu0 0.0
        %790 = vmatprep.subr.mxu0 0.0
        %791 = vmatpush1.msra.mxu0 0.0
        %792 = vmatprep.subr.mxu0 0.0
        %793 = vmatpush1.msra.mxu0 0.0
        %794 = vmatprep.subr.mxu0 0.0
        %795 = vmatpush1.msra.mxu0 0.0
        %796 = vmatprep.subr.mxu0 0.0
        %797 = vmatpush1.msra.mxu0 0.0
        %798 = vmatprep.subr.mxu0 0.0
        %799 = vmatpush1.msra.mxu0 0.0
        %800 = vmatprep.subr.mxu0 0.0
        %801 = vmatpush1.msra.mxu0 0.0
        %802 = vmatprep.subr.mxu0 0.0
        %803 = vmatpush1.msra.mxu0 0.0
        %804 = vmatprep.subr.mxu0 0.0
        %805 = vmatpush1.msra.mxu0 0.0
        %806 = vmatprep.subr.mxu0 0.0
        %807 = vmatpush1.msra.mxu0 0.0
        %808 = vmatprep.subr.mxu0 0.0
        %809 = vmatpush1.msra.mxu0 0.0
        %810 = vmatprep.subr.mxu0 0.0
        %811 = vmatpush1.msra.mxu0 0.0
        %812 = vmatprep.subr.mxu0 0.0
        %813 = vmatpush1.msra.mxu0 0.0
        %814 = vmatprep.subr.mxu0 0.0
        %815 = vmatpush1.msra.mxu0 0.0
        %816 = vmatprep.subr.mxu0 0.0
        %817 = vmatpush1.msra.mxu0 0.0
        %818 = vmatprep.mubr.f32.mxu0 0.0
        %819 = vmatmul.mubr.f32.gmra.mrb[0].mxu0 %v681
        %v820 = vpop.f32.mrb[0].mxu0
        %v821 = vadd.f32 0.0, %v820
        %v822 = vpop.f32.mrb[0].mxu0
        %v823 = vadd.f32 0.0, %v822
        %824 = vdwg.mxu0
        %v825 = vmax.f32 %v750, 0.0
        %v826 = vmax.f32 %v752, 0.0
        %v827 = vmax.f32 %v821, 0.0
        %v828 = vmax.f32 %v823, 0.0
        %v829 = vstv %s441
        %v830 = vmul.f32 %v829, %v825
        %v831 = vmul.f32 %v829, %v826
        %v832 = vmul.f32 %v829, %v827
        %v833 = vmul.f32 %v829, %v828
        %834 = vst [vmem:[%s426] sm:$0xff] %v830
        %835 = vst [vmem:[%s426 + $0x8] sm:$0xff] %v831
        %836 = vst [vmem:[%s426 + $0x10] sm:$0xff] %v832
        %837 = vst [vmem:[%s426 + $0x18] sm:$0xff] %v833
        %v838 = vld [vmem:[%s407] sm:$0xff]
        %v839 = vld [vmem:[%s407 + $0x8] sm:$0xff]
        %v840 = vld [vmem:[%s3] sm:$0xff]
        %v841 = vld [vmem:[%s3 + $0x8] sm:$0xff]
        %v843 = vsel %vm460, %v840, 0
        %v846 = vsel %vm460, %v841, 0
        %848 = vmatprep.subr.mxu0 0.0
        %849 = vmatpush1.msra.mxu0 %v838
        %850 = vmatprep.subr.mxu0 0.0
        %851 = vmatpush1.msra.mxu0 %v839
        %852 = vmatprep.subr.mxu0 0.0
        %853 = vmatpush1.msra.mxu0 0.0
        %854 = vmatprep.subr.mxu0 0.0
        %855 = vmatpush1.msra.mxu0 0.0
        %856 = vmatprep.subr.mxu0 0.0
        %857 = vmatpush1.msra.mxu0 0.0
        %858 = vmatprep.subr.mxu0 0.0
        %859 = vmatpush1.msra.mxu0 0.0
        %860 = vmatprep.subr.mxu0 0.0
        %861 = vmatpush1.msra.mxu0 0.0
        %862 = vmatprep.subr.mxu0 0.0
        %863 = vmatpush1.msra.mxu0 0.0
        %864 = vmatprep.subr.mxu0 0.0
        %865 = vmatpush1.msra.mxu0 0.0
        %866 = vmatprep.subr.mxu0 0.0
        %867 = vmatpush1.msra.mxu0 0.0
        %868 = vmatprep.subr.mxu0 0.0
        %869 = vmatpush1.msra.mxu0 0.0
        %870 = vmatprep.subr.mxu0 0.0
        %871 = vmatpush1.msra.mxu0 0.0
        %872 = vmatprep.subr.mxu0 0.0
        %873 = vmatpush1.msra.mxu0 0.0
        %874 = vmatprep.subr.mxu0 0.0
        %875 = vmatpush1.msra.mxu0 0.0
        %876 = vmatprep.subr.mxu0 0.0
        %877 = vmatpush1.msra.mxu0 0.0
        %878 = vmatprep.subr.mxu0 0.0
        %879 = vmatpush1.msra.mxu0 0.0
        %880 = vmatprep.subr.mxu0 0.0
        %881 = vmatpush1.msra.mxu0 0.0
        %882 = vmatprep.subr.mxu0 0.0
        %883 = vmatpush1.msra.mxu0 0.0
        %884 = vmatprep.subr.mxu0 0.0
        %885 = vmatpush1.msra.mxu0 0.0
        %886 = vmatprep.subr.mxu0 0.0
        %887 = vmatpush1.msra.mxu0 0.0
        %888 = vmatprep.subr.mxu0 0.0
        %889 = vmatpush1.msra.mxu0 0.0
        %890 = vmatprep.subr.mxu0 0.0
        %891 = vmatpush1.msra.mxu0 0.0
        %892 = vmatprep.subr.mxu0 0.0
        %893 = vmatpush1.msra.mxu0 0.0
        %894 = vmatprep.subr.mxu0 0.0
        %895 = vmatpush1.msra.mxu0 0.0
        %896 = vmatprep.subr.mxu0 0.0
        %897 = vmatpush1.msra.mxu0 0.0
        %898 = vmatprep.subr.mxu0 0.0
        %899 = vmatpush1.msra.mxu0 0.0
        %900 = vmatprep.subr.mxu0 0.0
        %901 = vmatpush1.msra.mxu0 0.0
        %902 = vmatprep.subr.mxu0 0.0
        %903 = vmatpush1.msra.mxu0 0.0
        %904 = vmatprep.subr.mxu0 0.0
        %905 = vmatpush1.msra.mxu0 0.0
        %906 = vmatprep.subr.mxu0 0.0
        %907 = vmatpush1.msra.mxu0 0.0
        %908 = vmatprep.subr.mxu0 0.0
        %909 = vmatpush1.msra.mxu0 0.0
        %910 = vmatprep.subr.mxu0 0.0
        %911 = vmatpush1.msra.mxu0 0.0
        %912 = vmatprep.mubr.f32.mxu0 0.0
        %913 = vmatmul.mubr.f32.gmra.mrb[0].mxu0 %v843
        %v914 = vpop.f32.mrb[0].mxu0
        %v915 = vadd.f32 0.0, %v914
        %v916 = vpop.f32.mrb[0].mxu0
        %917 = vmatprep.mubr.f32.mxu0 0.0
        %918 = vmatmul.mubr.f32.gmra.mrb[0].mxu0 %v846
        %v919 = vpop.f32.mrb[0].mxu0
        %v920 = vadd.f32 0.0, %v919
        %v921 = vpop.f32.mrb[0].mxu0
        %922 = vdwg.mxu0
        %v923 = vmax.f32 %v915, 0.0
        %v924 = vmax.f32 %v920, 0.0
        %v925 = vadd.f32 %v923, %v838
        %v926 = vadd.f32 %v924, %v839
        %v927 = vmax.f32 %v925, 0.0
        %v928 = vmax.f32 %v926, 0.0
        %v929 = vld [vmem:[%s5] sm:$0xff]
        %v930 = vld [vmem:[%s5 + $0x8] sm:$0xff]
        %v931 = vld [vmem:[%s5 + $0x10] sm:$0xff]
        %v932 = vld [vmem:[%s5 + $0x18] sm:$0xff]
        %v934 = vsel %vm460, %v929, 0
        %v937 = vsel %vm460, %v930, 0
        %v940 = vsel %vm460, %v931, 0
        %v943 = vsel %vm460, %v932, 0
        %945 = vmatprep.subr.mxu0 0.0
        %946 = vmatpush1.msra.mxu0 %v927
        %947 = vmatprep.subr.mxu0 0.0
        %948 = vmatpush1.msra.mxu0 %v928
        %949 = vmatprep.subr.mxu0 0.0
        %950 = vmatpush1.msra.mxu0 0.0
        %951 = vmatprep.subr.mxu0 0.0
        %952 = vmatpush1.msra.mxu0 0.0
        %953 = vmatprep.subr.mxu0 0.0
        %954 = vmatpush1.msra.mxu0 0.0
        %955 = vmatprep.subr.mxu0 0.0
        %956 = vmatpush1.msra.mxu0 0.0
        %957 = vmatprep.subr.mxu0 0.0
        %958 = vmatpush1.msra.mxu0 0.0
        %959 = vmatprep.subr.mxu0 0.0
        %960 = vmatpush1.msra.mxu0 0.0
        %961 = vmatprep.subr.mxu0 0.0
        %962 = vmatpush1.msra.mxu0 0.0
        %963 = vmatprep.subr.mxu0 0.0
        %964 = vmatpush1.msra.mxu0 0.0
        %965 = vmatprep.subr.mxu0 0.0
        %966 = vmatpush1.msra.mxu0 0.0
        %967 = vmatprep.subr.mxu0 0.0
        %968 = vmatpush1.msra.mxu0 0.0
        %969 = vmatprep.subr.mxu0 0.0
        %970 = vmatpush1.msra.mxu0 0.0
        %971 = vmatprep.subr.mxu0 0.0
        %972 = vmatpush1.msra.mxu0 0.0
        %973 = vmatprep.subr.mxu0 0.0
        %974 = vmatpush1.msra.mxu0 0.0
        %975 = vmatprep.subr.mxu0 0.0
        %976 = vmatpush1.msra.mxu0 0.0
        %977 = vmatprep.subr.mxu0 0.0
        %978 = vmatpush1.msra.mxu0 0.0
        %979 = vmatprep.subr.mxu0 0.0
        %980 = vmatpush1.msra.mxu0 0.0
        %981 = vmatprep.subr.mxu0 0.0
        %982 = vmatpush1.msra.mxu0 0.0
        %983 = vmatprep.subr.mxu0 0.0
        %984 = vmatpush1.msra.mxu0 0.0
        %985 = vmatprep.subr.mxu0 0.0
        %986 = vmatpush1.msra.mxu0 0.0
        %987 = vmatprep.subr.mxu0 0.0
        %988 = vmatpush1.msra.mxu0 0.0
        %989 = vmatprep.subr.mxu0 0.0
        %990 = vmatpush1.msra.mxu0 0.0
        %991 = vmatprep.subr.mxu0 0.0
        %992 = vmatpush1.msra.mxu0 0.0
        %993 = vmatprep.subr.mxu0 0.0
        %994 = vmatpush1.msra.mxu0 0.0
        %995 = vmatprep.subr.mxu0 0.0
        %996 = vmatpush1.msra.mxu0 0.0
        %997 = vmatprep.subr.mxu0 0.0
        %998 = vmatpush1.msra.mxu0 0.0
        %999 = vmatprep.subr.mxu0 0.0
        %1000 = vmatpush1.msra.mxu0 0.0
        %1001 = vmatprep.subr.mxu0 0.0
        %1002 = vmatpush1.msra.mxu0 0.0
        %1003 = vmatprep.subr.mxu0 0.0
        %1004 = vmatpush1.msra.mxu0 0.0
        %1005 = vmatprep.subr.mxu0 0.0
        %1006 = vmatpush1.msra.mxu0 0.0
        %1007 = vmatprep.subr.mxu0 0.0
        %1008 = vmatpush1.msra.mxu0 0.0
        %1009 = vmatprep.mubr.f32.mxu0 0.0
        %1010 = vmatmul.mubr.f32.gmra.mrb[0].mxu0 %v934
        %v1011 = vpop.f32.mrb[0].mxu0
        %v1012 = vadd.f32 0.0, %v1011
        %v1013 = vpop.f32.mrb[0].mxu0
        %1014 = vmatprep.mubr.f32.mxu0 0.0
        %1015 = vmatmul.mubr.f32.gmra.mrb[0].mxu0 %v937
        %v1016 = vpop.f32.mrb[0].mxu0
        %v1017 = vadd.f32 0.0, %v1016
        %v1018 = vpop.f32.mrb[0].mxu0
        %1019 = vmatprep.mubr.f32.mxu0 0.0
        %1020 = vmatmul.mubr.f32.gmra.mrb[0].mxu0 %v940
        %v1021 = vpop.f32.mrb[0].mxu0
        %v1022 = vadd.f32 0.0, %v1021
        %v1023 = vpop.f32.mrb[0].mxu0
        %1024 = vmatprep.mubr.f32.mxu0 0.0
        %1025 = vmatmul.mubr.f32.gmra.mrb[0].mxu0 %v943
        %v1026 = vpop.f32.mrb[0].mxu0
        %v1027 = vadd.f32 0.0, %v1026
        %v1028 = vpop.f32.mrb[0].mxu0
        %1029 = vdwg.mxu0
        %v1030 = vmax.f32 %v1012, 0.0
        %v1031 = vmax.f32 %v1017, 0.0
        %v1032 = vmax.f32 %v1022, 0.0
        %v1033 = vmax.f32 %v1027, 0.0
        %v1034 = vstv %s444
        %v1035 = vmul.f32 %v1034, %v1030
        %v1036 = vmul.f32 %v1034, %v1031
        %v1037 = vmul.f32 %v1034, %v1032
        %v1038 = vmul.f32 %v1034, %v1033
        %1039 = vst [vmem:[%s435] sm:$0xff] %v1035
        %1040 = vst [vmem:[%s435 + $0x8] sm:$0xff] %v1036
        %1041 = vst [vmem:[%s435 + $0x10] sm:$0xff] %v1037
        %1042 = vst [vmem:[%s435 + $0x18] sm:$0xff] %v1038
        %s1043 = smul.u32 4, %s26
        %p1044 = scmp.lt.s32.totalorder %s25, 1
        %s1045 = scalar_select %p1044, %s25, 1
        %p1046 = scmp.lt.s32.totalorder %s1043, 3
        %s1047 = scalar_select %p1046, %s1043, 3
        %s1048 = smul.addr %s1045, 8
        %s1049 = sadd.s32 %s1047, %s1048
        %s1050 = smul.addr %s1049, 8
        %s1051 = scalar_lea.vmem %s6, %s1050
        %s1052 = smul.u32 4, %s26
        %p1053 = scmp.lt.s32.totalorder %s25, 1
        %s1054 = scalar_select %p1053, %s25, 1
        %p1055 = scmp.lt.s32.totalorder %s1052, 3
        %s1056 = scalar_select %p1055, %s1052, 3
        %s1057 = smul.addr %s1054, 4
        %s1058 = sadd.s32 %s1056, %s1057
        %s1059 = smul.addr %s1058, 8
        %s1060 = scalar_lea.vmem %s7, %s1059
        %p1061 = scmp.lt.s32.totalorder %s25, 1
        %s1062 = scalar_select %p1061, %s25, 1
        %p1063 = scmp.lt.s32.totalorder %s26, 0
        %s1064 = scalar_select %p1063, %s26, 0
        %s1065 = smul.addr %s1062, 4
        %s1066 = sadd.s32 %s1064, %s1065
        %s1067 = smul.addr %s1066, 8
        %s1068 = scalar_lea.vmem %s8, %s1067
        // Predicated region
        $region49: #{cell_forward.3} parent=43 // pred_check
          %p1069 = pneg %p193
        $region50: #{cell_forward.3} parent=43 // pred_check_branch
          %1071 = sbr.rel (%p1069) target = $region52
        $region51: #{cell_forward.3} parent=43 // pred_region
          %s1072 = smul.u32 4, %s26
        $region52: #{cell_forward.3} parent=43 // pred_fallthru
          _
        // Predicated region
        $region53: #{cell_forward.3} parent=43 // pred_check
          %p1073 = pneg %p221
        $region54: #{cell_forward.3} parent=43 // pred_check_branch
          %1075 = sbr.rel (%p1073) target = $region56
        $region55: #{cell_forward.3} parent=43 // pred_region
          %s1076 = smul.u32 4, %s26
        $region56: #{cell_forward.3} parent=43 // pred_fallthru
          _
        // Predicated region
        $region57: #{cell_forward.3} parent=43 // pred_check
          %p1077 = pneg %p249
        $region58: #{cell_forward.3} parent=43 // pred_check_branch
          %1079 = sbr.rel (%p1077) target = $region60
        $region59: #{cell_forward.3} parent=43 // pred_region
          _
        $region60: #{cell_forward.3} parent=43 // pred_fallthru
          _
      $region44: #{cell_forward.3} parent=5 // pred_fallthru
        _
      %p1080 = scmp.le.s32.totalorder 2, %s16
      // Predicated region
      $region61: #{cell_forward.3} parent=5 // pred_check
        %p1081 = pneg %p1080
      $region62: #{cell_forward.3} parent=5 // pred_check_branch
        %1083 = sbr.rel (%p1081) target = $region64
      $region63: #{cell_forward.3} parent=5 // pred_region
        %s1084 = ssub.s32 %s16, 2
        // Predicated region
        $region65: #{cell_forward.3} parent=63 // pred_check
          %p1085 = pneg %p199
        $region66: #{cell_forward.3} parent=63 // pred_check_branch
          %1087 = sbr.rel (%p1085) target = $region68
        $region67: #{cell_forward.3} parent=63 // pred_region
          %s1088 = smul.u32 4, %s28
          %p1089 = scmp.lt.s32.totalorder %s27, 1
          %s1090 = scalar_select %p1089, %s27, 1
          %p1091 = scmp.lt.s32.totalorder %s1088, 3
          %s1092 = scalar_select %p1091, %s1088, 3
          %s1093 = smul.addr %s1090, 8
          %s1094 = sadd.s32 %s1092, %s1093
          %s1095 = smul.addr %s1094, 8
          %s1096 = scalar_lea.vmem %s6, %s1095
        $region68: #{cell_forward.3} parent=63 // pred_fallthru
          _
        // Predicated region
        $region69: #{cell_forward.3} parent=63 // pred_check
          %p1097 = pneg %p227
        $region70: #{cell_forward.3} parent=63 // pred_check_branch
          %1099 = sbr.rel (%p1097) target = $region72
        $region71: #{cell_forward.3} parent=63 // pred_region
          %s1100 = smul.u32 4, %s28
          %p1101 = scmp.lt.s32.totalorder %s27, 1
          %s1102 = scalar_select %p1101, %s27, 1
          %p1103 = scmp.lt.s32.totalorder %s1100, 3
          %s1104 = scalar_select %p1103, %s1100, 3
          %s1105 = smul.addr %s1102, 4
          %s1106 = sadd.s32 %s1104, %s1105
          %s1107 = smul.addr %s1106, 8
          %s1108 = scalar_lea.vmem %s7, %s1107
        $region72: #{cell_forward.3} parent=63 // pred_fallthru
          _
        // Predicated region
        $region73: #{cell_forward.3} parent=63 // pred_check
          %p1109 = pneg %p255
        $region74: #{cell_forward.3} parent=63 // pred_check_branch
          %1111 = sbr.rel (%p1109) target = $region76
        $region75: #{cell_forward.3} parent=63 // pred_region
          %p1112 = scmp.lt.s32.totalorder %s27, 1
          %s1113 = scalar_select %p1112, %s27, 1
          %p1114 = scmp.lt.s32.totalorder %s28, 0
          %s1115 = scalar_select %p1114, %s28, 0
          %s1116 = smul.addr %s1113, 4
          %s1117 = sadd.s32 %s1115, %s1116
          %s1118 = smul.addr %s1117, 8
          %s1119 = scalar_lea.vmem %s8, %s1118
        $region76: #{cell_forward.3} parent=63 // pred_fallthru
          _
      $region64: #{cell_forward.3} parent=5 // pred_fallthru
        _
    $region6: #{cell_forward.3} parent=1 // loop_footer
      %s20 = sadd.s32 1, %s16
    $region7: #{cell_forward.3} parent=1 // loop_footer_branch
      %15 = sbr.rel target = $region3
    $region8: #{cell_forward.3} parent=1 // loop_exit
      _
    %1120 = vsyncpa [#allocation3], 1
    %s1121 = scalar_lea.sflag [#allocation3], 1
    %1122 = vsyncpa %s1121, 1

</llo_original>
